<compile_context>
chip_gen: v5e
topology: v5e:2x2
jax: 0.10.0
libtpu: 0.0.40
codegen_flags: <defaults>
</compile_context>

<pallas_src>
import functools
import math

import jax
import jax.numpy as jnp
from jax.experimental import pallas as pl
from jax.experimental.pallas import tpu as pltpu

# ----------------------------- model config (small) -------------------------
BATCH = 2
SEQ = 8                       # max_length
HIDDEN = 32
NUM_HEADS = 2
HEAD_DIM = HIDDEN // NUM_HEADS
INTERMEDIATE = 4 * HIDDEN     # 128 (lane-dense intermediate)
NUM_LAYERS = 2
VOCAB = 128                   # padded to a lane-dense one-hot width
TYPE_VOCAB = 2
LN_EPS = 1e-12

WEIGHT_KEYS = ("wqkv", "bqkv", "wo", "bo", "ln1_g", "ln1_b",
               "wi", "bi", "wo2", "bo2", "ln2_g", "ln2_b")


# ----------------------------- in-kernel helpers ------------------------------
def _gelu(x):
    # TODO(synk): HF BERT uses erf-GELU; tanh approximation used here (EUP tanh).
    c = math.sqrt(2.0 / math.pi)
    return 0.5 * x * (1.0 + jnp.tanh(c * (x + 0.044715 * x * x * x)))


def _layernorm(x, g, b, eps):
    mu = jnp.mean(x, axis=-1, keepdims=True)
    var = jnp.mean(jnp.square(x - mu), axis=-1, keepdims=True)
    return (x - mu) * jax.lax.rsqrt(var + eps) * g + b


def _bf16_dot(x_f32, w_bf16, b_f32):
    """bf16 MXU operands, f32 accumulation, f32 bias add."""
    return jnp.dot(x_f32.astype(jnp.bfloat16), w_bf16,
                   preferred_element_type=jnp.float32) + b_f32


# ----------------------------- fully fused forward kernel ---------------------
def _bert_kernel(tok_ref, mask_ref,
                 word_emb_ref, pos_emb_ref, type_emb_ref, emb_ln_g_ref, emb_ln_b_ref,
                 wqkv_ref, bqkv_ref, wo_ref, bo_ref, ln1g_ref, ln1b_ref,
                 wi_ref, bi_ref, wo2_ref, bo2_ref, ln2g_ref, ln2b_ref,
                 cls_ref, *,
                 num_layers, num_heads, head_dim, hidden, batch, seq, vocab,
                 scale, eps):
    B, S, H = batch, seq, hidden
    R = B * S

    # ---- additive attention-mask bias (HF convention), computed in-kernel ----
    mask_bias = (1.0 - mask_ref[...]) * -10000.0                    # (B, 1, S) f32

    # ---- embeddings: token gather as a one-hot MXU matmul (no XLA gather) ----
    tok = tok_ref[...]                                              # (R, 1) int32
    onehot = (jax.lax.broadcasted_iota(jnp.int32, (R, vocab), 1) == tok)
    x = jnp.dot(onehot.astype(jnp.bfloat16), word_emb_ref[...],
                preferred_element_type=jnp.float32)                 # (R, H) f32
    pos = jnp.concatenate([pos_emb_ref[...]] * B, axis=0)           # (R, H)
    x = x + pos + type_emb_ref[...][0:1, :]                         # token_type_id == 0
    x = _layernorm(x, emb_ln_g_ref[...], emb_ln_b_ref[...], eps)

    # ---- transformer layers: static unroll, weights stay VMEM-resident -------
    for l in range(num_layers):
        # fused QKV projection: one (B*S, H) @ (H, 3H) MXU pass for the batch
        qkv = _bf16_dot(x, wqkv_ref[l], bqkv_ref[l])                # (R, 3H) f32

        # multi-head attention, batched over B via 3-D einsums
        ctx_parts = []
        for h in range(num_heads):                                  # static (2)
            lo = h * head_dim
            qh = qkv[:, lo:lo + head_dim].reshape(B, S, head_dim).astype(jnp.bfloat16)
            kh = qkv[:, H + lo:H + lo + head_dim].reshape(B, S, head_dim).astype(jnp.bfloat16)
            vh = qkv[:, 2 * H + lo:2 * H + lo + head_dim].reshape(B, S, head_dim)
            s = jnp.einsum('bqd,bkd->bqk', qh, kh,
                           preferred_element_type=jnp.float32) * scale
            s = s + mask_bias                                       # (B, S, S)
            s = s - jnp.max(s, axis=-1, keepdims=True)
            p = jnp.exp(s)
            p = p * pl.reciprocal(jnp.sum(p, axis=-1, keepdims=True), approx=True)
            ctx_h = jnp.einsum('bqk,bkd->bqd', p.astype(jnp.bfloat16),
                               vh.astype(jnp.bfloat16),
                               preferred_element_type=jnp.float32)  # (B, S, hd)
            ctx_parts.append(ctx_h.reshape(R, head_dim))
        ctx = jnp.concatenate(ctx_parts, axis=-1)                   # (R, H)

        # attention output projection + residual + LayerNorm
        attn_out = _bf16_dot(ctx, wo_ref[l], bo_ref[l])
        x = _layernorm(attn_out + x, ln1g_ref[l], ln1b_ref[l], eps)

        # feed-forward (intermediate is 128-wide -> lane-dense vregs)
        inter = _gelu(_bf16_dot(x, wi_ref[l], bi_ref[l]))           # (R, 4H)
        ffn_out = _bf16_dot(inter, wo2_ref[l], bo2_ref[l])          # (R, H)
        x = _layernorm(ffn_out + x, ln2g_ref[l], ln2b_ref[l], eps)

    # ---- [CLS] token (row 0 of each sequence) --------------------------------
    cls_ref[...] = x.reshape(B, S, H)[:, 0, :].astype(cls_ref.dtype)


# ----------------------------- parameter init --------------------------------
def init_params(key):
    def normal(k, shape):
        return 0.02 * jax.random.normal(k, shape, dtype=jnp.float32)

    keys = iter(jax.random.split(key, 3 + NUM_LAYERS * 6))
    params = {
        "word_emb": normal(next(keys), (VOCAB, HIDDEN)).astype(jnp.bfloat16),
        "pos_emb": normal(next(keys), (SEQ, HIDDEN)),
        "type_emb": normal(next(keys), (TYPE_VOCAB, HIDDEN)),
        "emb_ln_g": jnp.ones((1, HIDDEN), jnp.float32),
        "emb_ln_b": jnp.zeros((1, HIDDEN), jnp.float32),
    }
    per_layer = {k: [] for k in WEIGHT_KEYS}
    for _ in range(NUM_LAYERS):
        wq = normal(next(keys), (HIDDEN, HIDDEN))
        wk = normal(next(keys), (HIDDEN, HIDDEN))
        wv = normal(next(keys), (HIDDEN, HIDDEN))
        wo = normal(next(keys), (HIDDEN, HIDDEN))
        wi = normal(next(keys), (HIDDEN, INTERMEDIATE))
        wo2 = normal(next(keys), (INTERMEDIATE, HIDDEN))
        per_layer["wqkv"].append(
            jnp.concatenate([wq, wk, wv], axis=1).astype(jnp.bfloat16))
        per_layer["bqkv"].append(jnp.zeros((1, 3 * HIDDEN), jnp.float32))
        per_layer["wo"].append(wo.astype(jnp.bfloat16))
        per_layer["bo"].append(jnp.zeros((1, HIDDEN), jnp.float32))
        per_layer["ln1_g"].append(jnp.ones((1, HIDDEN), jnp.float32))
        per_layer["ln1_b"].append(jnp.zeros((1, HIDDEN), jnp.float32))
        per_layer["wi"].append(wi.astype(jnp.bfloat16))
        per_layer["bi"].append(jnp.zeros((1, INTERMEDIATE), jnp.float32))
        per_layer["wo2"].append(wo2.astype(jnp.bfloat16))
        per_layer["bo2"].append(jnp.zeros((1, HIDDEN), jnp.float32))
        per_layer["ln2_g"].append(jnp.ones((1, HIDDEN), jnp.float32))
        per_layer["ln2_b"].append(jnp.zeros((1, HIDDEN), jnp.float32))
    for k in WEIGHT_KEYS:
        params[k] = jnp.stack(per_layer[k], axis=0)    # (NUM_LAYERS, ...)
    return params


# ----------------------------- forward ---------------------------------------
@jax.jit
def bert_encoder_forward(params, tokens, mask):
    """tokens: (B, S) int32, mask: (B, S) {0,1} -> (B, HIDDEN) [CLS] embeddings."""
    B, S = tokens.shape
    tok_col = tokens.reshape(B * S, 1).astype(jnp.int32)       # rows = b*S + s
    mask_b1s = mask.astype(jnp.float32).reshape(B, 1, S)       # raw mask; bias in-kernel

    inputs = [tok_col, mask_b1s,
              params["word_emb"], params["pos_emb"], params["type_emb"],
              params["emb_ln_g"], params["emb_ln_b"]]
    inputs += [params[k] for k in WEIGHT_KEYS]

    kernel = functools.partial(
        _bert_kernel,
        num_layers=NUM_LAYERS, num_heads=NUM_HEADS, head_dim=HEAD_DIM,
        hidden=HIDDEN, batch=B, seq=S, vocab=VOCAB,
        scale=1.0 / math.sqrt(HEAD_DIM), eps=LN_EPS)

    return pl.pallas_call(
        kernel,
        out_shape=jax.ShapeDtypeStruct((B, HIDDEN), jnp.float32),
        in_specs=[pl.BlockSpec(memory_space=pltpu.MemorySpace.VMEM)] * len(inputs),
        out_specs=pl.BlockSpec(memory_space=pltpu.MemorySpace.VMEM),
    )(*inputs)


# ----------------------------- main -------------------------------------------
if __name__ == "__main__":
    key = jax.random.PRNGKey(0)
    pkey, tkey = jax.random.split(key)
    params = init_params(pkey)

    tokens = jax.random.randint(tkey, (BATCH, SEQ), 0, VOCAB, dtype=jnp.int32)
    mask = jnp.array([[1, 1, 1, 1, 1, 1, 1, 1],
                      [1, 1, 1, 1, 1, 0, 0, 0]], dtype=jnp.float32)

    out = bert_encoder_forward(params, tokens, mask)
    out = jax.block_until_ready(out)
    assert out.shape == (BATCH, HIDDEN)
    assert jnp.all(jnp.isfinite(out))
    print("KERNEL_OK")
</pallas_src>

<mosaic_0001>
module attributes {stable_mosaic.version = 11 : i64} {
  func.func @_bert_kernel(%arg0: memref<16x1xi32, #tpu.memory_space<vmem>>, %arg1: memref<2x1x8xf32, #tpu.memory_space<vmem>>, %arg2: memref<128x32xbf16, #tpu.memory_space<vmem>>, %arg3: memref<8x32xf32, #tpu.memory_space<vmem>>, %arg4: memref<2x32xf32, #tpu.memory_space<vmem>>, %arg5: memref<1x32xf32, #tpu.memory_space<vmem>>, %arg6: memref<1x32xf32, #tpu.memory_space<vmem>>, %arg7: memref<2x32x96xbf16, #tpu.memory_space<vmem>>, %arg8: memref<2x1x96xf32, #tpu.memory_space<vmem>>, %arg9: memref<2x32x32xbf16, #tpu.memory_space<vmem>>, %arg10: memref<2x1x32xf32, #tpu.memory_space<vmem>>, %arg11: memref<2x1x32xf32, #tpu.memory_space<vmem>>, %arg12: memref<2x1x32xf32, #tpu.memory_space<vmem>>, %arg13: memref<2x32x128xbf16, #tpu.memory_space<vmem>>, %arg14: memref<2x1x128xf32, #tpu.memory_space<vmem>>, %arg15: memref<2x128x32xbf16, #tpu.memory_space<vmem>>, %arg16: memref<2x1x32xf32, #tpu.memory_space<vmem>>, %arg17: memref<2x1x32xf32, #tpu.memory_space<vmem>>, %arg18: memref<2x1x32xf32, #tpu.memory_space<vmem>>, %arg19: memref<2x32xf32, #tpu.memory_space<vmem>>) attributes {dimension_semantics = [], scalar_prefetch = 0 : i64, scratch_operands = 0 : i64, tpu.core_type = #tpu.core_type<tc>} {
    %c0 = arith.constant 0 : index
    %c0_0 = arith.constant 0 : index
    %c0_1 = arith.constant 0 : index
    %0 = vector.load %arg1[%c0, %c0_0, %c0_1] : memref<2x1x8xf32, #tpu.memory_space<vmem>>, vector<2x1x8xf32>
    %cst = arith.constant 1.000000e+00 : f32
    %1 = vector.broadcast %cst : f32 to vector<2x1x8xf32>
    %2 = arith.subf %1, %0 : vector<2x1x8xf32>
    %cst_2 = arith.constant -1.000000e+04 : f32
    %3 = vector.broadcast %cst_2 : f32 to vector<2x1x8xf32>
    %4 = arith.mulf %2, %3 : vector<2x1x8xf32>
    %c0_3 = arith.constant 0 : index
    %c0_4 = arith.constant 0 : index
    %5 = vector.load %arg0[%c0_3, %c0_4] : memref<16x1xi32, #tpu.memory_space<vmem>>, vector<16x1xi32>
    %6 = tpu.iota {dimensions = array<i32: 1>} : vector<16x128xi32>
    %7 = vector.broadcast %5 : vector<16x1xi32> to vector<16x128xi32>
    %8 = arith.cmpi eq, %6, %7 : vector<16x128xi32>
    %9 = arith.extui %8 : vector<16x128xi1> to vector<16x128xi32>
    %10 = arith.sitofp %9 : vector<16x128xi32> to vector<16x128xf32>
    %11 = arith.truncf %10 : vector<16x128xf32> to vector<16x128xbf16>
    %c0_5 = arith.constant 0 : index
    %c0_6 = arith.constant 0 : index
    %12 = vector.load %arg2[%c0_5, %c0_6] : memref<128x32xbf16, #tpu.memory_space<vmem>>, vector<128x32xbf16>
    %cst_7 = arith.constant dense<0.000000e+00> : vector<16x32xf32>
    %13 = tpu.matmul %11, %12, %cst_7 {dimension_numbers = #tpu.dot_dimension_numbers<[1], [0], [0], [1], [0, 0, 1, 1], [], []>} : vector<16x128xbf16>, vector<128x32xbf16>, vector<16x32xf32> -> vector<16x32xf32>
    %c0_8 = arith.constant 0 : index
    %c0_9 = arith.constant 0 : index
    %14 = vector.load %arg3[%c0_8, %c0_9] : memref<8x32xf32, #tpu.memory_space<vmem>>, vector<8x32xf32>
    %15 = tpu.concatenate %14, %14 in 0 : vector<8x32xf32>, vector<8x32xf32> -> vector<16x32xf32>
    %16 = arith.addf %13, %15 : vector<16x32xf32>
    %c0_10 = arith.constant 0 : index
    %c0_11 = arith.constant 0 : index
    %17 = vector.load %arg4[%c0_10, %c0_11] : memref<2x32xf32, #tpu.memory_space<vmem>>, vector<2x32xf32>
    %18 = vector.extract_strided_slice %17 {offsets = [0, 0], sizes = [1, 32], strides = [1, 1]} : vector<2x32xf32> to vector<1x32xf32>
    %19 = vector.broadcast %18 : vector<1x32xf32> to vector<16x32xf32>
    %20 = arith.addf %16, %19 : vector<16x32xf32>
    %c0_12 = arith.constant 0 : index
    %c0_13 = arith.constant 0 : index
    %21 = vector.load %arg5[%c0_12, %c0_13] : memref<1x32xf32, #tpu.memory_space<vmem>>, vector<1x32xf32>
    %c0_14 = arith.constant 0 : index
    %c0_15 = arith.constant 0 : index
    %22 = vector.load %arg6[%c0_14, %c0_15] : memref<1x32xf32, #tpu.memory_space<vmem>>, vector<1x32xf32>
    %cst_16 = arith.constant dense<0.000000e+00> : vector<16xf32>
    %23 = vector.multi_reduction <add>, %20, %cst_16 [1] : vector<16x32xf32> to vector<16xf32>
    %24 = vector.shape_cast %23 : vector<16xf32> to vector<16x1xf32>
    %cst_17 = arith.constant 3.200000e+01 : f32
    %25 = vector.broadcast %cst_17 : f32 to vector<16x1xf32>
    %26 = arith.divf %24, %25 : vector<16x1xf32>
    %27 = vector.broadcast %26 : vector<16x1xf32> to vector<16x32xf32>
    %28 = arith.subf %20, %27 : vector<16x32xf32>
    %29 = arith.mulf %28, %28 : vector<16x32xf32>
    %cst_18 = arith.constant dense<0.000000e+00> : vector<16xf32>
    %30 = vector.multi_reduction <add>, %29, %cst_18 [1] : vector<16x32xf32> to vector<16xf32>
    %31 = vector.shape_cast %30 : vector<16xf32> to vector<16x1xf32>
    %cst_19 = arith.constant 3.200000e+01 : f32
    %32 = vector.broadcast %cst_19 : f32 to vector<16x1xf32>
    %33 = arith.divf %31, %32 : vector<16x1xf32>
    %34 = vector.broadcast %26 : vector<16x1xf32> to vector<16x32xf32>
    %35 = arith.subf %20, %34 : vector<16x32xf32>
    %cst_20 = arith.constant 9.99999996E-13 : f32
    %36 = vector.broadcast %cst_20 : f32 to vector<16x1xf32>
    %37 = arith.addf %33, %36 : vector<16x1xf32>
    %38 = math.rsqrt %37 : vector<16x1xf32>
    %39 = vector.broadcast %38 : vector<16x1xf32> to vector<16x32xf32>
    %40 = arith.mulf %35, %39 : vector<16x32xf32>
    %41 = vector.broadcast %21 : vector<1x32xf32> to vector<16x32xf32>
    %42 = arith.mulf %40, %41 : vector<16x32xf32>
    %43 = vector.broadcast %22 : vector<1x32xf32> to vector<16x32xf32>
    %44 = arith.addf %42, %43 : vector<16x32xf32>
    %c0_21 = arith.constant 0 : index
    %c0_22 = arith.constant 0 : index
    %c0_23 = arith.constant 0 : index
    %45 = vector.load %arg7[%c0_21, %c0_22, %c0_23] : memref<2x32x96xbf16, #tpu.memory_space<vmem>>, vector<1x32x96xbf16>
    %46 = vector.shape_cast %45 : vector<1x32x96xbf16> to vector<32x96xbf16>
    %c0_24 = arith.constant 0 : index
    %c0_25 = arith.constant 0 : index
    %c0_26 = arith.constant 0 : index
    %47 = vector.load %arg8[%c0_24, %c0_25, %c0_26] : memref<2x1x96xf32, #tpu.memory_space<vmem>>, vector<1x1x96xf32>
    %48 = vector.shape_cast %47 : vector<1x1x96xf32> to vector<1x96xf32>
    %49 = arith.truncf %44 : vector<16x32xf32> to vector<16x32xbf16>
    %cst_27 = arith.constant dense<0.000000e+00> : vector<16x96xf32>
    %50 = tpu.matmul %49, %46, %cst_27 {dimension_numbers = #tpu.dot_dimension_numbers<[1], [0], [0], [1], [0, 0, 1, 1], [], []>} : vector<16x32xbf16>, vector<32x96xbf16>, vector<16x96xf32> -> vector<16x96xf32>
    %51 = vector.broadcast %48 : vector<1x96xf32> to vector<16x96xf32>
    %52 = arith.addf %50, %51 : vector<16x96xf32>
    %53 = vector.extract_strided_slice %52 {offsets = [0, 0], sizes = [16, 16], strides = [1, 1]} : vector<16x96xf32> to vector<16x16xf32>
    %54 = vector.shape_cast %53 : vector<16x16xf32> to vector<2x8x16xf32>
    %55 = arith.truncf %54 : vector<2x8x16xf32> to vector<2x8x16xbf16>
    %56 = vector.extract_strided_slice %52 {offsets = [0, 32], sizes = [16, 16], strides = [1, 1]} : vector<16x96xf32> to vector<16x16xf32>
    %57 = vector.shape_cast %56 : vector<16x16xf32> to vector<2x8x16xf32>
    %58 = arith.truncf %57 : vector<2x8x16xf32> to vector<2x8x16xbf16>
    %59 = vector.extract_strided_slice %52 {offsets = [0, 64], sizes = [16, 16], strides = [1, 1]} : vector<16x96xf32> to vector<16x16xf32>
    %60 = vector.shape_cast %59 : vector<16x16xf32> to vector<2x8x16xf32>
    "tpu.trace_start"() <{level = 10 : i32, message = "bqd,bkd->bqk"}> : () -> ()
    %cst_28 = arith.constant dense<0.000000e+00> : vector<2x8x8xf32>
    %61 = tpu.matmul %55, %58, %cst_28 {dimension_numbers = #tpu.dot_dimension_numbers<[2], [2], [1], [1], [0, 0, 0, 1, 1, 1], [0], [0]>} : vector<2x8x16xbf16>, vector<2x8x16xbf16>, vector<2x8x8xf32> -> vector<2x8x8xf32>
    "tpu.trace_stop"() : () -> ()
    %cst_29 = arith.constant 2.500000e-01 : f32
    %62 = vector.broadcast %cst_29 : f32 to vector<2x8x8xf32>
    %63 = arith.mulf %61, %62 : vector<2x8x8xf32>
    %64 = vector.broadcast %4 : vector<2x1x8xf32> to vector<2x8x8xf32>
    %65 = arith.addf %63, %64 : vector<2x8x8xf32>
    %cst_30 = arith.constant dense<0xFF800000> : vector<2x8xf32>
    %66 = vector.multi_reduction <maximumf>, %65, %cst_30 [2] : vector<2x8x8xf32> to vector<2x8xf32>
    %67 = vector.shape_cast %66 : vector<2x8xf32> to vector<2x8x1xf32>
    %68 = vector.broadcast %67 : vector<2x8x1xf32> to vector<2x8x8xf32>
    %69 = arith.subf %65, %68 : vector<2x8x8xf32>
    %70 = math.exp %69 : vector<2x8x8xf32>
    %cst_31 = arith.constant dense<0.000000e+00> : vector<2x8xf32>
    %71 = vector.multi_reduction <add>, %70, %cst_31 [2] : vector<2x8x8xf32> to vector<2x8xf32>
    %72 = vector.shape_cast %71 : vector<2x8xf32> to vector<2x8x1xf32>
    %73 = tpu.reciprocal %72 {approx = true} : vector<2x8x1xf32> -> vector<2x8x1xf32>
    %74 = vector.broadcast %73 : vector<2x8x1xf32> to vector<2x8x8xf32>
    %75 = arith.mulf %70, %74 : vector<2x8x8xf32>
    %76 = arith.truncf %75 : vector<2x8x8xf32> to vector<2x8x8xbf16>
    %77 = arith.truncf %60 : vector<2x8x16xf32> to vector<2x8x16xbf16>
    "tpu.trace_start"() <{level = 10 : i32, message = "bqk,bkd->bqd"}> : () -> ()
    %cst_32 = arith.constant dense<0.000000e+00> : vector<2x8x16xf32>
    %78 = tpu.matmul %76, %77, %cst_32 {dimension_numbers = #tpu.dot_dimension_numbers<[2], [1], [1], [2], [0, 0, 0, 1, 1, 2], [0], [0]>} : vector<2x8x8xbf16>, vector<2x8x16xbf16>, vector<2x8x16xf32> -> vector<2x8x16xf32>
    "tpu.trace_stop"() : () -> ()
    %79 = vector.shape_cast %78 : vector<2x8x16xf32> to vector<16x16xf32>
    %80 = vector.extract_strided_slice %52 {offsets = [0, 16], sizes = [16, 16], strides = [1, 1]} : vector<16x96xf32> to vector<16x16xf32>
    %81 = vector.shape_cast %80 : vector<16x16xf32> to vector<2x8x16xf32>
    %82 = arith.truncf %81 : vector<2x8x16xf32> to vector<2x8x16xbf16>
    %83 = vector.extract_strided_slice %52 {offsets = [0, 48], sizes = [16, 16], strides = [1, 1]} : vector<16x96xf32> to vector<16x16xf32>
    %84 = vector.shape_cast %83 : vector<16x16xf32> to vector<2x8x16xf32>
    %85 = arith.truncf %84 : vector<2x8x16xf32> to vector<2x8x16xbf16>
    %86 = vector.extract_strided_slice %52 {offsets = [0, 80], sizes = [16, 16], strides = [1, 1]} : vector<16x96xf32> to vector<16x16xf32>
    %87 = vector.shape_cast %86 : vector<16x16xf32> to vector<2x8x16xf32>
    "tpu.trace_start"() <{level = 10 : i32, message = "bqd,bkd->bqk"}> : () -> ()
    %cst_33 = arith.constant dense<0.000000e+00> : vector<2x8x8xf32>
    %88 = tpu.matmul %82, %85, %cst_33 {dimension_numbers = #tpu.dot_dimension_numbers<[2], [2], [1], [1], [0, 0, 0, 1, 1, 1], [0], [0]>} : vector<2x8x16xbf16>, vector<2x8x16xbf16>, vector<2x8x8xf32> -> vector<2x8x8xf32>
    "tpu.trace_stop"() : () -> ()
    %cst_34 = arith.constant 2.500000e-01 : f32
    %89 = vector.broadcast %cst_34 : f32 to vector<2x8x8xf32>
    %90 = arith.mulf %88, %89 : vector<2x8x8xf32>
    %91 = vector.broadcast %4 : vector<2x1x8xf32> to vector<2x8x8xf32>
    %92 = arith.addf %90, %91 : vector<2x8x8xf32>
    %cst_35 = arith.constant dense<0xFF800000> : vector<2x8xf32>
    %93 = vector.multi_reduction <maximumf>, %92, %cst_35 [2] : vector<2x8x8xf32> to vector<2x8xf32>
    %94 = vector.shape_cast %93 : vector<2x8xf32> to vector<2x8x1xf32>
    %95 = vector.broadcast %94 : vector<2x8x1xf32> to vector<2x8x8xf32>
    %96 = arith.subf %92, %95 : vector<2x8x8xf32>
    %97 = math.exp %96 : vector<2x8x8xf32>
    %cst_36 = arith.constant dense<0.000000e+00> : vector<2x8xf32>
    %98 = vector.multi_reduction <add>, %97, %cst_36 [2] : vector<2x8x8xf32> to vector<2x8xf32>
    %99 = vector.shape_cast %98 : vector<2x8xf32> to vector<2x8x1xf32>
    %100 = tpu.reciprocal %99 {approx = true} : vector<2x8x1xf32> -> vector<2x8x1xf32>
    %101 = vector.broadcast %100 : vector<2x8x1xf32> to vector<2x8x8xf32>
    %102 = arith.mulf %97, %101 : vector<2x8x8xf32>
    %103 = arith.truncf %102 : vector<2x8x8xf32> to vector<2x8x8xbf16>
    %104 = arith.truncf %87 : vector<2x8x16xf32> to vector<2x8x16xbf16>
    "tpu.trace_start"() <{level = 10 : i32, message = "bqk,bkd->bqd"}> : () -> ()
    %cst_37 = arith.constant dense<0.000000e+00> : vector<2x8x16xf32>
    %105 = tpu.matmul %103, %104, %cst_37 {dimension_numbers = #tpu.dot_dimension_numbers<[2], [1], [1], [2], [0, 0, 0, 1, 1, 2], [0], [0]>} : vector<2x8x8xbf16>, vector<2x8x16xbf16>, vector<2x8x16xf32> -> vector<2x8x16xf32>
    "tpu.trace_stop"() : () -> ()
    %106 = vector.shape_cast %105 : vector<2x8x16xf32> to vector<16x16xf32>
    %107 = tpu.concatenate %79, %106 in 1 : vector<16x16xf32>, vector<16x16xf32> -> vector<16x32xf32>
    %c0_38 = arith.constant 0 : index
    %c0_39 = arith.constant 0 : index
    %c0_40 = arith.constant 0 : index
    %108 = vector.load %arg9[%c0_38, %c0_39, %c0_40] : memref<2x32x32xbf16, #tpu.memory_space<vmem>>, vector<1x32x32xbf16>
    %109 = vector.shape_cast %108 : vector<1x32x32xbf16> to vector<32x32xbf16>
    %c0_41 = arith.constant 0 : index
    %c0_42 = arith.constant 0 : index
    %c0_43 = arith.constant 0 : index
    %110 = vector.load %arg10[%c0_41, %c0_42, %c0_43] : memref<2x1x32xf32, #tpu.memory_space<vmem>>, vector<1x1x32xf32>
    %111 = vector.shape_cast %110 : vector<1x1x32xf32> to vector<1x32xf32>
    %112 = arith.truncf %107 : vector<16x32xf32> to vector<16x32xbf16>
    %cst_44 = arith.constant dense<0.000000e+00> : vector<16x32xf32>
    %113 = tpu.matmul %112, %109, %cst_44 {dimension_numbers = #tpu.dot_dimension_numbers<[1], [0], [0], [1], [0, 0, 1, 1], [], []>} : vector<16x32xbf16>, vector<32x32xbf16>, vector<16x32xf32> -> vector<16x32xf32>
    %114 = vector.broadcast %111 : vector<1x32xf32> to vector<16x32xf32>
    %115 = arith.addf %113, %114 : vector<16x32xf32>
    %116 = arith.addf %115, %44 : vector<16x32xf32>
    %c0_45 = arith.constant 0 : index
    %c0_46 = arith.constant 0 : index
    %c0_47 = arith.constant 0 : index
    %117 = vector.load %arg11[%c0_45, %c0_46, %c0_47] : memref<2x1x32xf32, #tpu.memory_space<vmem>>, vector<1x1x32xf32>
    %118 = vector.shape_cast %117 : vector<1x1x32xf32> to vector<1x32xf32>
    %c0_48 = arith.constant 0 : index
    %c0_49 = arith.constant 0 : index
    %c0_50 = arith.constant 0 : index
    %119 = vector.load %arg12[%c0_48, %c0_49, %c0_50] : memref<2x1x32xf32, #tpu.memory_space<vmem>>, vector<1x1x32xf32>
    %120 = vector.shape_cast %119 : vector<1x1x32xf32> to vector<1x32xf32>
    %cst_51 = arith.constant dense<0.000000e+00> : vector<16xf32>
    %121 = vector.multi_reduction <add>, %116, %cst_51 [1] : vector<16x32xf32> to vector<16xf32>
    %122 = vector.shape_cast %121 : vector<16xf32> to vector<16x1xf32>
    %cst_52 = arith.constant 3.200000e+01 : f32
    %123 = vector.broadcast %cst_52 : f32 to vector<16x1xf32>
    %124 = arith.divf %122, %123 : vector<16x1xf32>
    %125 = vector.broadcast %124 : vector<16x1xf32> to vector<16x32xf32>
    %126 = arith.subf %116, %125 : vector<16x32xf32>
    %127 = arith.mulf %126, %126 : vector<16x32xf32>
    %cst_53 = arith.constant dense<0.000000e+00> : vector<16xf32>
    %128 = vector.multi_reduction <add>, %127, %cst_53 [1] : vector<16x32xf32> to vector<16xf32>
    %129 = vector.shape_cast %128 : vector<16xf32> to vector<16x1xf32>
    %cst_54 = arith.constant 3.200000e+01 : f32
    %130 = vector.broadcast %cst_54 : f32 to vector<16x1xf32>
    %131 = arith.divf %129, %130 : vector<16x1xf32>
    %132 = vector.broadcast %124 : vector<16x1xf32> to vector<16x32xf32>
    %133 = arith.subf %116, %132 : vector<16x32xf32>
    %cst_55 = arith.constant 9.99999996E-13 : f32
    %134 = vector.broadcast %cst_55 : f32 to vector<16x1xf32>
    %135 = arith.addf %131, %134 : vector<16x1xf32>
    %136 = math.rsqrt %135 : vector<16x1xf32>
    %137 = vector.broadcast %136 : vector<16x1xf32> to vector<16x32xf32>
    %138 = arith.mulf %133, %137 : vector<16x32xf32>
    %139 = vector.broadcast %118 : vector<1x32xf32> to vector<16x32xf32>
    %140 = arith.mulf %138, %139 : vector<16x32xf32>
    %141 = vector.broadcast %120 : vector<1x32xf32> to vector<16x32xf32>
    %142 = arith.addf %140, %141 : vector<16x32xf32>
    %c0_56 = arith.constant 0 : index
    %c0_57 = arith.constant 0 : index
    %c0_58 = arith.constant 0 : index
    %143 = vector.load %arg13[%c0_56, %c0_57, %c0_58] : memref<2x32x128xbf16, #tpu.memory_space<vmem>>, vector<1x32x128xbf16>
    %144 = vector.shape_cast %143 : vector<1x32x128xbf16> to vector<32x128xbf16>
    %c0_59 = arith.constant 0 : index
    %c0_60 = arith.constant 0 : index
    %c0_61 = arith.constant 0 : index
    %145 = vector.load %arg14[%c0_59, %c0_60, %c0_61] : memref<2x1x128xf32, #tpu.memory_space<vmem>>, vector<1x1x128xf32>
    %146 = vector.shape_cast %145 : vector<1x1x128xf32> to vector<1x128xf32>
    %147 = arith.truncf %142 : vector<16x32xf32> to vector<16x32xbf16>
    %cst_62 = arith.constant dense<0.000000e+00> : vector<16x128xf32>
    %148 = tpu.matmul %147, %144, %cst_62 {dimension_numbers = #tpu.dot_dimension_numbers<[1], [0], [0], [1], [0, 0, 1, 1], [], []>} : vector<16x32xbf16>, vector<32x128xbf16>, vector<16x128xf32> -> vector<16x128xf32>
    %149 = vector.broadcast %146 : vector<1x128xf32> to vector<16x128xf32>
    %150 = arith.addf %148, %149 : vector<16x128xf32>
    %cst_63 = arith.constant 5.000000e-01 : f32
    %151 = vector.broadcast %cst_63 : f32 to vector<16x128xf32>
    %152 = arith.mulf %151, %150 : vector<16x128xf32>
    %cst_64 = arith.constant 4.471500e-02 : f32
    %153 = vector.broadcast %cst_64 : f32 to vector<16x128xf32>
    %154 = arith.mulf %153, %150 : vector<16x128xf32>
    %155 = arith.mulf %154, %150 : vector<16x128xf32>
    %156 = arith.mulf %155, %150 : vector<16x128xf32>
    %157 = arith.addf %150, %156 : vector<16x128xf32>
    %cst_65 = arith.constant 0.797884583 : f32
    %158 = vector.broadcast %cst_65 : f32 to vector<16x128xf32>
    %159 = arith.mulf %158, %157 : vector<16x128xf32>
    %160 = math.tanh %159 : vector<16x128xf32>
    %cst_66 = arith.constant 1.000000e+00 : f32
    %161 = vector.broadcast %cst_66 : f32 to vector<16x128xf32>
    %162 = arith.addf %161, %160 : vector<16x128xf32>
    %163 = arith.mulf %152, %162 : vector<16x128xf32>
    %c0_67 = arith.constant 0 : index
    %c0_68 = arith.constant 0 : index
    %c0_69 = arith.constant 0 : index
    %164 = vector.load %arg15[%c0_67, %c0_68, %c0_69] : memref<2x128x32xbf16, #tpu.memory_space<vmem>>, vector<1x128x32xbf16>
    %165 = vector.shape_cast %164 : vector<1x128x32xbf16> to vector<128x32xbf16>
    %c0_70 = arith.constant 0 : index
    %c0_71 = arith.constant 0 : index
    %c0_72 = arith.constant 0 : index
    %166 = vector.load %arg16[%c0_70, %c0_71, %c0_72] : memref<2x1x32xf32, #tpu.memory_space<vmem>>, vector<1x1x32xf32>
    %167 = vector.shape_cast %166 : vector<1x1x32xf32> to vector<1x32xf32>
    %168 = arith.truncf %163 : vector<16x128xf32> to vector<16x128xbf16>
    %cst_73 = arith.constant dense<0.000000e+00> : vector<16x32xf32>
    %169 = tpu.matmul %168, %165, %cst_73 {dimension_numbers = #tpu.dot_dimension_numbers<[1], [0], [0], [1], [0, 0, 1, 1], [], []>} : vector<16x128xbf16>, vector<128x32xbf16>, vector<16x32xf32> -> vector<16x32xf32>
    %170 = vector.broadcast %167 : vector<1x32xf32> to vector<16x32xf32>
    %171 = arith.addf %169, %170 : vector<16x32xf32>
    %172 = arith.addf %171, %142 : vector<16x32xf32>
    %c0_74 = arith.constant 0 : index
    %c0_75 = arith.constant 0 : index
    %c0_76 = arith.constant 0 : index
    %173 = vector.load %arg17[%c0_74, %c0_75, %c0_76] : memref<2x1x32xf32, #tpu.memory_space<vmem>>, vector<1x1x32xf32>
    %174 = vector.shape_cast %173 : vector<1x1x32xf32> to vector<1x32xf32>
    %c0_77 = arith.constant 0 : index
    %c0_78 = arith.constant 0 : index
    %c0_79 = arith.constant 0 : index
    %175 = vector.load %arg18[%c0_77, %c0_78, %c0_79] : memref<2x1x32xf32, #tpu.memory_space<vmem>>, vector<1x1x32xf32>
    %176 = vector.shape_cast %175 : vector<1x1x32xf32> to vector<1x32xf32>
    %cst_80 = arith.constant dense<0.000000e+00> : vector<16xf32>
    %177 = vector.multi_reduction <add>, %172, %cst_80 [1] : vector<16x32xf32> to vector<16xf32>
    %178 = vector.shape_cast %177 : vector<16xf32> to vector<16x1xf32>
    %cst_81 = arith.constant 3.200000e+01 : f32
    %179 = vector.broadcast %cst_81 : f32 to vector<16x1xf32>
    %180 = arith.divf %178, %179 : vector<16x1xf32>
    %181 = vector.broadcast %180 : vector<16x1xf32> to vector<16x32xf32>
    %182 = arith.subf %172, %181 : vector<16x32xf32>
    %183 = arith.mulf %182, %182 : vector<16x32xf32>
    %cst_82 = arith.constant dense<0.000000e+00> : vector<16xf32>
    %184 = vector.multi_reduction <add>, %183, %cst_82 [1] : vector<16x32xf32> to vector<16xf32>
    %185 = vector.shape_cast %184 : vector<16xf32> to vector<16x1xf32>
    %cst_83 = arith.constant 3.200000e+01 : f32
    %186 = vector.broadcast %cst_83 : f32 to vector<16x1xf32>
    %187 = arith.divf %185, %186 : vector<16x1xf32>
    %188 = vector.broadcast %180 : vector<16x1xf32> to vector<16x32xf32>
    %189 = arith.subf %172, %188 : vector<16x32xf32>
    %cst_84 = arith.constant 9.99999996E-13 : f32
    %190 = vector.broadcast %cst_84 : f32 to vector<16x1xf32>
    %191 = arith.addf %187, %190 : vector<16x1xf32>
    %192 = math.rsqrt %191 : vector<16x1xf32>
    %193 = vector.broadcast %192 : vector<16x1xf32> to vector<16x32xf32>
    %194 = arith.mulf %189, %193 : vector<16x32xf32>
    %195 = vector.broadcast %174 : vector<1x32xf32> to vector<16x32xf32>
    %196 = arith.mulf %194, %195 : vector<16x32xf32>
    %197 = vector.broadcast %176 : vector<1x32xf32> to vector<16x32xf32>
    %198 = arith.addf %196, %197 : vector<16x32xf32>
    %c1 = arith.constant 1 : index
    %c0_85 = arith.constant 0 : index
    %c0_86 = arith.constant 0 : index
    %199 = vector.load %arg7[%c1, %c0_85, %c0_86] : memref<2x32x96xbf16, #tpu.memory_space<vmem>>, vector<1x32x96xbf16>
    %200 = vector.shape_cast %199 : vector<1x32x96xbf16> to vector<32x96xbf16>
    %c1_87 = arith.constant 1 : index
    %c0_88 = arith.constant 0 : index
    %c0_89 = arith.constant 0 : index
    %201 = vector.load %arg8[%c1_87, %c0_88, %c0_89] : memref<2x1x96xf32, #tpu.memory_space<vmem>>, vector<1x1x96xf32>
    %202 = vector.shape_cast %201 : vector<1x1x96xf32> to vector<1x96xf32>
    %203 = arith.truncf %198 : vector<16x32xf32> to vector<16x32xbf16>
    %cst_90 = arith.constant dense<0.000000e+00> : vector<16x96xf32>
    %204 = tpu.matmul %203, %200, %cst_90 {dimension_numbers = #tpu.dot_dimension_numbers<[1], [0], [0], [1], [0, 0, 1, 1], [], []>} : vector<16x32xbf16>, vector<32x96xbf16>, vector<16x96xf32> -> vector<16x96xf32>
    %205 = vector.broadcast %202 : vector<1x96xf32> to vector<16x96xf32>
    %206 = arith.addf %204, %205 : vector<16x96xf32>
    %207 = vector.extract_strided_slice %206 {offsets = [0, 0], sizes = [16, 16], strides = [1, 1]} : vector<16x96xf32> to vector<16x16xf32>
    %208 = vector.shape_cast %207 : vector<16x16xf32> to vector<2x8x16xf32>
    %209 = arith.truncf %208 : vector<2x8x16xf32> to vector<2x8x16xbf16>
    %210 = vector.extract_strided_slice %206 {offsets = [0, 32], sizes = [16, 16], strides = [1, 1]} : vector<16x96xf32> to vector<16x16xf32>
    %211 = vector.shape_cast %210 : vector<16x16xf32> to vector<2x8x16xf32>
    %212 = arith.truncf %211 : vector<2x8x16xf32> to vector<2x8x16xbf16>
    %213 = vector.extract_strided_slice %206 {offsets = [0, 64], sizes = [16, 16], strides = [1, 1]} : vector<16x96xf32> to vector<16x16xf32>
    %214 = vector.shape_cast %213 : vector<16x16xf32> to vector<2x8x16xf32>
    "tpu.trace_start"() <{level = 10 : i32, message = "bqd,bkd->bqk"}> : () -> ()
    %cst_91 = arith.constant dense<0.000000e+00> : vector<2x8x8xf32>
    %215 = tpu.matmul %209, %212, %cst_91 {dimension_numbers = #tpu.dot_dimension_numbers<[2], [2], [1], [1], [0, 0, 0, 1, 1, 1], [0], [0]>} : vector<2x8x16xbf16>, vector<2x8x16xbf16>, vector<2x8x8xf32> -> vector<2x8x8xf32>
    "tpu.trace_stop"() : () -> ()
    %cst_92 = arith.constant 2.500000e-01 : f32
    %216 = vector.broadcast %cst_92 : f32 to vector<2x8x8xf32>
    %217 = arith.mulf %215, %216 : vector<2x8x8xf32>
    %218 = vector.broadcast %4 : vector<2x1x8xf32> to vector<2x8x8xf32>
    %219 = arith.addf %217, %218 : vector<2x8x8xf32>
    %cst_93 = arith.constant dense<0xFF800000> : vector<2x8xf32>
    %220 = vector.multi_reduction <maximumf>, %219, %cst_93 [2] : vector<2x8x8xf32> to vector<2x8xf32>
    %221 = vector.shape_cast %220 : vector<2x8xf32> to vector<2x8x1xf32>
    %222 = vector.broadcast %221 : vector<2x8x1xf32> to vector<2x8x8xf32>
    %223 = arith.subf %219, %222 : vector<2x8x8xf32>
    %224 = math.exp %223 : vector<2x8x8xf32>
    %cst_94 = arith.constant dense<0.000000e+00> : vector<2x8xf32>
    %225 = vector.multi_reduction <add>, %224, %cst_94 [2] : vector<2x8x8xf32> to vector<2x8xf32>
    %226 = vector.shape_cast %225 : vector<2x8xf32> to vector<2x8x1xf32>
    %227 = tpu.reciprocal %226 {approx = true} : vector<2x8x1xf32> -> vector<2x8x1xf32>
    %228 = vector.broadcast %227 : vector<2x8x1xf32> to vector<2x8x8xf32>
    %229 = arith.mulf %224, %228 : vector<2x8x8xf32>
    %230 = arith.truncf %229 : vector<2x8x8xf32> to vector<2x8x8xbf16>
    %231 = arith.truncf %214 : vector<2x8x16xf32> to vector<2x8x16xbf16>
    "tpu.trace_start"() <{level = 10 : i32, message = "bqk,bkd->bqd"}> : () -> ()
    %cst_95 = arith.constant dense<0.000000e+00> : vector<2x8x16xf32>
    %232 = tpu.matmul %230, %231, %cst_95 {dimension_numbers = #tpu.dot_dimension_numbers<[2], [1], [1], [2], [0, 0, 0, 1, 1, 2], [0], [0]>} : vector<2x8x8xbf16>, vector<2x8x16xbf16>, vector<2x8x16xf32> -> vector<2x8x16xf32>
    "tpu.trace_stop"() : () -> ()
    %233 = vector.shape_cast %232 : vector<2x8x16xf32> to vector<16x16xf32>
    %234 = vector.extract_strided_slice %206 {offsets = [0, 16], sizes = [16, 16], strides = [1, 1]} : vector<16x96xf32> to vector<16x16xf32>
    %235 = vector.shape_cast %234 : vector<16x16xf32> to vector<2x8x16xf32>
    %236 = arith.truncf %235 : vector<2x8x16xf32> to vector<2x8x16xbf16>
    %237 = vector.extract_strided_slice %206 {offsets = [0, 48], sizes = [16, 16], strides = [1, 1]} : vector<16x96xf32> to vector<16x16xf32>
    %238 = vector.shape_cast %237 : vector<16x16xf32> to vector<2x8x16xf32>
    %239 = arith.truncf %238 : vector<2x8x16xf32> to vector<2x8x16xbf16>
    %240 = vector.extract_strided_slice %206 {offsets = [0, 80], sizes = [16, 16], strides = [1, 1]} : vector<16x96xf32> to vector<16x16xf32>
    %241 = vector.shape_cast %240 : vector<16x16xf32> to vector<2x8x16xf32>
    "tpu.trace_start"() <{level = 10 : i32, message = "bqd,bkd->bqk"}> : () -> ()
    %cst_96 = arith.constant dense<0.000000e+00> : vector<2x8x8xf32>
    %242 = tpu.matmul %236, %239, %cst_96 {dimension_numbers = #tpu.dot_dimension_numbers<[2], [2], [1], [1], [0, 0, 0, 1, 1, 1], [0], [0]>} : vector<2x8x16xbf16>, vector<2x8x16xbf16>, vector<2x8x8xf32> -> vector<2x8x8xf32>
    "tpu.trace_stop"() : () -> ()
    %cst_97 = arith.constant 2.500000e-01 : f32
    %243 = vector.broadcast %cst_97 : f32 to vector<2x8x8xf32>
    %244 = arith.mulf %242, %243 : vector<2x8x8xf32>
    %245 = vector.broadcast %4 : vector<2x1x8xf32> to vector<2x8x8xf32>
    %246 = arith.addf %244, %245 : vector<2x8x8xf32>
    %cst_98 = arith.constant dense<0xFF800000> : vector<2x8xf32>
    %247 = vector.multi_reduction <maximumf>, %246, %cst_98 [2] : vector<2x8x8xf32> to vector<2x8xf32>
    %248 = vector.shape_cast %247 : vector<2x8xf32> to vector<2x8x1xf32>
    %249 = vector.broadcast %248 : vector<2x8x1xf32> to vector<2x8x8xf32>
    %250 = arith.subf %246, %249 : vector<2x8x8xf32>
    %251 = math.exp %250 : vector<2x8x8xf32>
    %cst_99 = arith.constant dense<0.000000e+00> : vector<2x8xf32>
    %252 = vector.multi_reduction <add>, %251, %cst_99 [2] : vector<2x8x8xf32> to vector<2x8xf32>
    %253 = vector.shape_cast %252 : vector<2x8xf32> to vector<2x8x1xf32>
    %254 = tpu.reciprocal %253 {approx = true} : vector<2x8x1xf32> -> vector<2x8x1xf32>
    %255 = vector.broadcast %254 : vector<2x8x1xf32> to vector<2x8x8xf32>
    %256 = arith.mulf %251, %255 : vector<2x8x8xf32>
    %257 = arith.truncf %256 : vector<2x8x8xf32> to vector<2x8x8xbf16>
    %258 = arith.truncf %241 : vector<2x8x16xf32> to vector<2x8x16xbf16>
    "tpu.trace_start"() <{level = 10 : i32, message = "bqk,bkd->bqd"}> : () -> ()
    %cst_100 = arith.constant dense<0.000000e+00> : vector<2x8x16xf32>
    %259 = tpu.matmul %257, %258, %cst_100 {dimension_numbers = #tpu.dot_dimension_numbers<[2], [1], [1], [2], [0, 0, 0, 1, 1, 2], [0], [0]>} : vector<2x8x8xbf16>, vector<2x8x16xbf16>, vector<2x8x16xf32> -> vector<2x8x16xf32>
    "tpu.trace_stop"() : () -> ()
    %260 = vector.shape_cast %259 : vector<2x8x16xf32> to vector<16x16xf32>
    %261 = tpu.concatenate %233, %260 in 1 : vector<16x16xf32>, vector<16x16xf32> -> vector<16x32xf32>
    %c1_101 = arith.constant 1 : index
    %c0_102 = arith.constant 0 : index
    %c0_103 = arith.constant 0 : index
    %262 = vector.load %arg9[%c1_101, %c0_102, %c0_103] : memref<2x32x32xbf16, #tpu.memory_space<vmem>>, vector<1x32x32xbf16>
    %263 = vector.shape_cast %262 : vector<1x32x32xbf16> to vector<32x32xbf16>
    %c1_104 = arith.constant 1 : index
    %c0_105 = arith.constant 0 : index
    %c0_106 = arith.constant 0 : index
    %264 = vector.load %arg10[%c1_104, %c0_105, %c0_106] : memref<2x1x32xf32, #tpu.memory_space<vmem>>, vector<1x1x32xf32>
    %265 = vector.shape_cast %264 : vector<1x1x32xf32> to vector<1x32xf32>
    %266 = arith.truncf %261 : vector<16x32xf32> to vector<16x32xbf16>
    %cst_107 = arith.constant dense<0.000000e+00> : vector<16x32xf32>
    %267 = tpu.matmul %266, %263, %cst_107 {dimension_numbers = #tpu.dot_dimension_numbers<[1], [0], [0], [1], [0, 0, 1, 1], [], []>} : vector<16x32xbf16>, vector<32x32xbf16>, vector<16x32xf32> -> vector<16x32xf32>
    %268 = vector.broadcast %265 : vector<1x32xf32> to vector<16x32xf32>
    %269 = arith.addf %267, %268 : vector<16x32xf32>
    %270 = arith.addf %269, %198 : vector<16x32xf32>
    %c1_108 = arith.constant 1 : index
    %c0_109 = arith.constant 0 : index
    %c0_110 = arith.constant 0 : index
    %271 = vector.load %arg11[%c1_108, %c0_109, %c0_110] : memref<2x1x32xf32, #tpu.memory_space<vmem>>, vector<1x1x32xf32>
    %272 = vector.shape_cast %271 : vector<1x1x32xf32> to vector<1x32xf32>
    %c1_111 = arith.constant 1 : index
    %c0_112 = arith.constant 0 : index
    %c0_113 = arith.constant 0 : index
    %273 = vector.load %arg12[%c1_111, %c0_112, %c0_113] : memref<2x1x32xf32, #tpu.memory_space<vmem>>, vector<1x1x32xf32>
    %274 = vector.shape_cast %273 : vector<1x1x32xf32> to vector<1x32xf32>
    %cst_114 = arith.constant dense<0.000000e+00> : vector<16xf32>
    %275 = vector.multi_reduction <add>, %270, %cst_114 [1] : vector<16x32xf32> to vector<16xf32>
    %276 = vector.shape_cast %275 : vector<16xf32> to vector<16x1xf32>
    %cst_115 = arith.constant 3.200000e+01 : f32
    %277 = vector.broadcast %cst_115 : f32 to vector<16x1xf32>
    %278 = arith.divf %276, %277 : vector<16x1xf32>
    %279 = vector.broadcast %278 : vector<16x1xf32> to vector<16x32xf32>
    %280 = arith.subf %270, %279 : vector<16x32xf32>
    %281 = arith.mulf %280, %280 : vector<16x32xf32>
    %cst_116 = arith.constant dense<0.000000e+00> : vector<16xf32>
    %282 = vector.multi_reduction <add>, %281, %cst_116 [1] : vector<16x32xf32> to vector<16xf32>
    %283 = vector.shape_cast %282 : vector<16xf32> to vector<16x1xf32>
    %cst_117 = arith.constant 3.200000e+01 : f32
    %284 = vector.broadcast %cst_117 : f32 to vector<16x1xf32>
    %285 = arith.divf %283, %284 : vector<16x1xf32>
    %286 = vector.broadcast %278 : vector<16x1xf32> to vector<16x32xf32>
    %287 = arith.subf %270, %286 : vector<16x32xf32>
    %cst_118 = arith.constant 9.99999996E-13 : f32
    %288 = vector.broadcast %cst_118 : f32 to vector<16x1xf32>
    %289 = arith.addf %285, %288 : vector<16x1xf32>
    %290 = math.rsqrt %289 : vector<16x1xf32>
    %291 = vector.broadcast %290 : vector<16x1xf32> to vector<16x32xf32>
    %292 = arith.mulf %287, %291 : vector<16x32xf32>
    %293 = vector.broadcast %272 : vector<1x32xf32> to vector<16x32xf32>
    %294 = arith.mulf %292, %293 : vector<16x32xf32>
    %295 = vector.broadcast %274 : vector<1x32xf32> to vector<16x32xf32>
    %296 = arith.addf %294, %295 : vector<16x32xf32>
    %c1_119 = arith.constant 1 : index
    %c0_120 = arith.constant 0 : index
    %c0_121 = arith.constant 0 : index
    %297 = vector.load %arg13[%c1_119, %c0_120, %c0_121] : memref<2x32x128xbf16, #tpu.memory_space<vmem>>, vector<1x32x128xbf16>
    %298 = vector.shape_cast %297 : vector<1x32x128xbf16> to vector<32x128xbf16>
    %c1_122 = arith.constant 1 : index
    %c0_123 = arith.constant 0 : index
    %c0_124 = arith.constant 0 : index
    %299 = vector.load %arg14[%c1_122, %c0_123, %c0_124] : memref<2x1x128xf32, #tpu.memory_space<vmem>>, vector<1x1x128xf32>
    %300 = vector.shape_cast %299 : vector<1x1x128xf32> to vector<1x128xf32>
    %301 = arith.truncf %296 : vector<16x32xf32> to vector<16x32xbf16>
    %cst_125 = arith.constant dense<0.000000e+00> : vector<16x128xf32>
    %302 = tpu.matmul %301, %298, %cst_125 {dimension_numbers = #tpu.dot_dimension_numbers<[1], [0], [0], [1], [0, 0, 1, 1], [], []>} : vector<16x32xbf16>, vector<32x128xbf16>, vector<16x128xf32> -> vector<16x128xf32>
    %303 = vector.broadcast %300 : vector<1x128xf32> to vector<16x128xf32>
    %304 = arith.addf %302, %303 : vector<16x128xf32>
    %cst_126 = arith.constant 5.000000e-01 : f32
    %305 = vector.broadcast %cst_126 : f32 to vector<16x128xf32>
    %306 = arith.mulf %305, %304 : vector<16x128xf32>
    %cst_127 = arith.constant 4.471500e-02 : f32
    %307 = vector.broadcast %cst_127 : f32 to vector<16x128xf32>
    %308 = arith.mulf %307, %304 : vector<16x128xf32>
    %309 = arith.mulf %308, %304 : vector<16x128xf32>
    %310 = arith.mulf %309, %304 : vector<16x128xf32>
    %311 = arith.addf %304, %310 : vector<16x128xf32>
    %cst_128 = arith.constant 0.797884583 : f32
    %312 = vector.broadcast %cst_128 : f32 to vector<16x128xf32>
    %313 = arith.mulf %312, %311 : vector<16x128xf32>
    %314 = math.tanh %313 : vector<16x128xf32>
    %cst_129 = arith.constant 1.000000e+00 : f32
    %315 = vector.broadcast %cst_129 : f32 to vector<16x128xf32>
    %316 = arith.addf %315, %314 : vector<16x128xf32>
    %317 = arith.mulf %306, %316 : vector<16x128xf32>
    %c1_130 = arith.constant 1 : index
    %c0_131 = arith.constant 0 : index
    %c0_132 = arith.constant 0 : index
    %318 = vector.load %arg15[%c1_130, %c0_131, %c0_132] : memref<2x128x32xbf16, #tpu.memory_space<vmem>>, vector<1x128x32xbf16>
    %319 = vector.shape_cast %318 : vector<1x128x32xbf16> to vector<128x32xbf16>
    %c1_133 = arith.constant 1 : index
    %c0_134 = arith.constant 0 : index
    %c0_135 = arith.constant 0 : index
    %320 = vector.load %arg16[%c1_133, %c0_134, %c0_135] : memref<2x1x32xf32, #tpu.memory_space<vmem>>, vector<1x1x32xf32>
    %321 = vector.shape_cast %320 : vector<1x1x32xf32> to vector<1x32xf32>
    %322 = arith.truncf %317 : vector<16x128xf32> to vector<16x128xbf16>
    %cst_136 = arith.constant dense<0.000000e+00> : vector<16x32xf32>
    %323 = tpu.matmul %322, %319, %cst_136 {dimension_numbers = #tpu.dot_dimension_numbers<[1], [0], [0], [1], [0, 0, 1, 1], [], []>} : vector<16x128xbf16>, vector<128x32xbf16>, vector<16x32xf32> -> vector<16x32xf32>
    %324 = vector.broadcast %321 : vector<1x32xf32> to vector<16x32xf32>
    %325 = arith.addf %323, %324 : vector<16x32xf32>
    %326 = arith.addf %325, %296 : vector<16x32xf32>
    %c1_137 = arith.constant 1 : index
    %c0_138 = arith.constant 0 : index
    %c0_139 = arith.constant 0 : index
    %327 = vector.load %arg17[%c1_137, %c0_138, %c0_139] : memref<2x1x32xf32, #tpu.memory_space<vmem>>, vector<1x1x32xf32>
    %328 = vector.shape_cast %327 : vector<1x1x32xf32> to vector<1x32xf32>
    %c1_140 = arith.constant 1 : index
    %c0_141 = arith.constant 0 : index
    %c0_142 = arith.constant 0 : index
    %329 = vector.load %arg18[%c1_140, %c0_141, %c0_142] : memref<2x1x32xf32, #tpu.memory_space<vmem>>, vector<1x1x32xf32>
    %330 = vector.shape_cast %329 : vector<1x1x32xf32> to vector<1x32xf32>
    %cst_143 = arith.constant dense<0.000000e+00> : vector<16xf32>
    %331 = vector.multi_reduction <add>, %326, %cst_143 [1] : vector<16x32xf32> to vector<16xf32>
    %332 = vector.shape_cast %331 : vector<16xf32> to vector<16x1xf32>
    %cst_144 = arith.constant 3.200000e+01 : f32
    %333 = vector.broadcast %cst_144 : f32 to vector<16x1xf32>
    %334 = arith.divf %332, %333 : vector<16x1xf32>
    %335 = vector.broadcast %334 : vector<16x1xf32> to vector<16x32xf32>
    %336 = arith.subf %326, %335 : vector<16x32xf32>
    %337 = arith.mulf %336, %336 : vector<16x32xf32>
    %cst_145 = arith.constant dense<0.000000e+00> : vector<16xf32>
    %338 = vector.multi_reduction <add>, %337, %cst_145 [1] : vector<16x32xf32> to vector<16xf32>
    %339 = vector.shape_cast %338 : vector<16xf32> to vector<16x1xf32>
    %cst_146 = arith.constant 3.200000e+01 : f32
    %340 = vector.broadcast %cst_146 : f32 to vector<16x1xf32>
    %341 = arith.divf %339, %340 : vector<16x1xf32>
    %342 = vector.broadcast %334 : vector<16x1xf32> to vector<16x32xf32>
    %343 = arith.subf %326, %342 : vector<16x32xf32>
    %cst_147 = arith.constant 9.99999996E-13 : f32
    %344 = vector.broadcast %cst_147 : f32 to vector<16x1xf32>
    %345 = arith.addf %341, %344 : vector<16x1xf32>
    %346 = math.rsqrt %345 : vector<16x1xf32>
    %347 = vector.broadcast %346 : vector<16x1xf32> to vector<16x32xf32>
    %348 = arith.mulf %343, %347 : vector<16x32xf32>
    %349 = vector.broadcast %328 : vector<1x32xf32> to vector<16x32xf32>
    %350 = arith.mulf %348, %349 : vector<16x32xf32>
    %351 = vector.broadcast %330 : vector<1x32xf32> to vector<16x32xf32>
    %352 = arith.addf %350, %351 : vector<16x32xf32>
    %353 = vector.shape_cast %352 : vector<16x32xf32> to vector<2x8x32xf32>
    %354 = vector.extract_strided_slice %353 {offsets = [0, 0, 0], sizes = [2, 1, 32], strides = [1, 1, 1]} : vector<2x8x32xf32> to vector<2x1x32xf32>
    %355 = vector.shape_cast %354 : vector<2x1x32xf32> to vector<2x32xf32>
    %c0_148 = arith.constant 0 : index
    %c0_149 = arith.constant 0 : index
    %356 = vector.load %arg19[%c0_148, %c0_149] : memref<2x32xf32, #tpu.memory_space<vmem>>, vector<2x32xf32>
    tpu.vector_store %arg19[%c0_148, %c0_149], %355 {strides = array<i32>} : memref<2x32xf32, #tpu.memory_space<vmem>>, vector<2x32xf32>,
    return
  }
}

</mosaic_0001>

<llo_original>
// kernel: bert_encoder_forward.1
$region0: #{bert_encoder_forward.1}
  #allocation0 [shape = 'u32[]', space=smem, size = 0x4, offset = 0x4, fixed_abs, tag = 'smem constant byte address 0x4 - core index']
  #allocation1 [shape = 'u32[72,128]{1,0:T(1,128)}', space=vmem, size = 0x9000, scoped, tag = 'internal scratch']
  %s0 = inlined_call_operand.vmem [shape: s32[16,1], index: 0, kind: input, shape index: {}]
  %s1 = inlined_call_operand.vmem [shape: f32[2,1,8], index: 1, kind: input, shape index: {}]
  %s2 = inlined_call_operand.vmem [shape: bf16[128,32], index: 2, kind: input, shape index: {}]
  %s3 = inlined_call_operand.vmem [shape: f32[8,32], index: 3, kind: input, shape index: {}]
  %s4 = inlined_call_operand.vmem [shape: f32[2,32], index: 4, kind: input, shape index: {}]
  %s5 = inlined_call_operand.vmem [shape: f32[1,32], index: 5, kind: input, shape index: {}]
  %s6 = inlined_call_operand.vmem [shape: f32[1,32], index: 6, kind: input, shape index: {}]
  %s7 = inlined_call_operand.vmem [shape: bf16[2,32,96], index: 7, kind: input, shape index: {}]
  %s8 = inlined_call_operand.vmem [shape: f32[2,1,96], index: 8, kind: input, shape index: {}]
  %s9 = inlined_call_operand.vmem [shape: bf16[2,32,32], index: 9, kind: input, shape index: {}]
  %s10 = inlined_call_operand.vmem [shape: f32[2,1,32], index: 10, kind: input, shape index: {}]
  %s11 = inlined_call_operand.vmem [shape: f32[2,1,32], index: 11, kind: input, shape index: {}]
  %s12 = inlined_call_operand.vmem [shape: f32[2,1,32], index: 12, kind: input, shape index: {}]
  %s13 = inlined_call_operand.vmem [shape: bf16[2,32,128], index: 13, kind: input, shape index: {}]
  %s14 = inlined_call_operand.vmem [shape: f32[2,1,128], index: 14, kind: input, shape index: {}]
  %s15 = inlined_call_operand.vmem [shape: bf16[2,128,32], index: 15, kind: input, shape index: {}]
  %s16 = inlined_call_operand.vmem [shape: f32[2,1,32], index: 16, kind: input, shape index: {}]
  %s17 = inlined_call_operand.vmem [shape: f32[2,1,32], index: 17, kind: input, shape index: {}]
  %s18 = inlined_call_operand.vmem [shape: f32[2,1,32], index: 18, kind: input, shape index: {}]
  %s19 = inlined_call_operand.hbm [shape: f32[2,32], index: 19, kind: output, shape index: {}]
  %s20 = sld [smem:[#allocation0]]
  $region86: #{bert_encoder_forward.1} parent=0
    _
  %s22 = ssub.s32 1, %s20
  %s23 = scalar_select 0, %s22, %s20
  $region1: #{bert_encoder_forward.1} parent=0
    #allocation2 [shape = 'u8[1024]{0}', space=vmem, size = 0x400, scoped, tag = 'output window, operand 0, single buffered']
    #allocation3 [shape = 's32[1]{0}', space=sflag, size = 0x4, scoped, tag = 'scoped memory for bert_encoder_forward.1']
    %24 = vsyncpa [#allocation3], 0
    // Predicated region
    $region2: #{bert_encoder_forward.1} parent=1 // pred_check
      _
    $region3: #{bert_encoder_forward.1} parent=1 // pred_check_branch
      %26 = sbr.rel (0) target = $region5
    $region4: #{bert_encoder_forward.1} parent=1 // pred_region
      _
    $region5: #{bert_encoder_forward.1} parent=1 // pred_fallthru
      _
    // Predicated region
    $region6: #{bert_encoder_forward.1} parent=1 // pred_check
      _
    $region7: #{bert_encoder_forward.1} parent=1 // pred_check_branch
      %28 = sbr.rel (0) target = $region9
    $region8: #{bert_encoder_forward.1} parent=1 // pred_region
      _
    $region9: #{bert_encoder_forward.1} parent=1 // pred_fallthru
      _
    // Predicated region
    $region10: #{bert_encoder_forward.1} parent=1 // pred_check
      _
    $region11: #{bert_encoder_forward.1} parent=1 // pred_check_branch
      %30 = sbr.rel (0) target = $region13
    $region12: #{bert_encoder_forward.1} parent=1 // pred_region
      _
    $region13: #{bert_encoder_forward.1} parent=1 // pred_fallthru
      _
    // Predicated region
    $region14: #{bert_encoder_forward.1} parent=1 // pred_check
      _
    $region15: #{bert_encoder_forward.1} parent=1 // pred_check_branch
      %32 = sbr.rel (0) target = $region17
    $region16: #{bert_encoder_forward.1} parent=1 // pred_region
      _
    $region17: #{bert_encoder_forward.1} parent=1 // pred_fallthru
      _
    // Predicated region
    $region18: #{bert_encoder_forward.1} parent=1 // pred_check
      _
    $region19: #{bert_encoder_forward.1} parent=1 // pred_check_branch
      %34 = sbr.rel (0) target = $region21
    $region20: #{bert_encoder_forward.1} parent=1 // pred_region
      _
    $region21: #{bert_encoder_forward.1} parent=1 // pred_fallthru
      _
    // Predicated region
    $region22: #{bert_encoder_forward.1} parent=1 // pred_check
      _
    $region23: #{bert_encoder_forward.1} parent=1 // pred_check_branch
      %36 = sbr.rel (0) target = $region25
    $region24: #{bert_encoder_forward.1} parent=1 // pred_region
      _
    $region25: #{bert_encoder_forward.1} parent=1 // pred_fallthru
      _
    // Predicated region
    $region26: #{bert_encoder_forward.1} parent=1 // pred_check
      _
    $region27: #{bert_encoder_forward.1} parent=1 // pred_check_branch
      %38 = sbr.rel (0) target = $region29
    $region28: #{bert_encoder_forward.1} parent=1 // pred_region
      _
    $region29: #{bert_encoder_forward.1} parent=1 // pred_fallthru
      _
    // Predicated region
    $region30: #{bert_encoder_forward.1} parent=1 // pred_check
      _
    $region31: #{bert_encoder_forward.1} parent=1 // pred_check_branch
      %40 = sbr.rel (0) target = $region33
    $region32: #{bert_encoder_forward.1} parent=1 // pred_region
      _
    $region33: #{bert_encoder_forward.1} parent=1 // pred_fallthru
      _
    // Predicated region
    $region34: #{bert_encoder_forward.1} parent=1 // pred_check
      _
    $region35: #{bert_encoder_forward.1} parent=1 // pred_check_branch
      %42 = sbr.rel (0) target = $region37
    $region36: #{bert_encoder_forward.1} parent=1 // pred_region
      _
    $region37: #{bert_encoder_forward.1} parent=1 // pred_fallthru
      _
    // Predicated region
    $region38: #{bert_encoder_forward.1} parent=1 // pred_check
      _
    $region39: #{bert_encoder_forward.1} parent=1 // pred_check_branch
      %44 = sbr.rel (0) target = $region41
    $region40: #{bert_encoder_forward.1} parent=1 // pred_region
      _
    $region41: #{bert_encoder_forward.1} parent=1 // pred_fallthru
      _
    // Predicated region
    $region42: #{bert_encoder_forward.1} parent=1 // pred_check
      _
    $region43: #{bert_encoder_forward.1} parent=1 // pred_check_branch
      %46 = sbr.rel (0) target = $region45
    $region44: #{bert_encoder_forward.1} parent=1 // pred_region
      _
    $region45: #{bert_encoder_forward.1} parent=1 // pred_fallthru
      _
    // Predicated region
    $region46: #{bert_encoder_forward.1} parent=1 // pred_check
      _
    $region47: #{bert_encoder_forward.1} parent=1 // pred_check_branch
      %48 = sbr.rel (0) target = $region49
    $region48: #{bert_encoder_forward.1} parent=1 // pred_region
      _
    $region49: #{bert_encoder_forward.1} parent=1 // pred_fallthru
      _
    // Predicated region
    $region50: #{bert_encoder_forward.1} parent=1 // pred_check
      _
    $region51: #{bert_encoder_forward.1} parent=1 // pred_check_branch
      %50 = sbr.rel (0) target = $region53
    $region52: #{bert_encoder_forward.1} parent=1 // pred_region
      _
    $region53: #{bert_encoder_forward.1} parent=1 // pred_fallthru
      _
    // Predicated region
    $region54: #{bert_encoder_forward.1} parent=1 // pred_check
      _
    $region55: #{bert_encoder_forward.1} parent=1 // pred_check_branch
      %52 = sbr.rel (0) target = $region57
    $region56: #{bert_encoder_forward.1} parent=1 // pred_region
      _
    $region57: #{bert_encoder_forward.1} parent=1 // pred_fallthru
      _
    // Predicated region
    $region58: #{bert_encoder_forward.1} parent=1 // pred_check
      _
    $region59: #{bert_encoder_forward.1} parent=1 // pred_check_branch
      %54 = sbr.rel (0) target = $region61
    $region60: #{bert_encoder_forward.1} parent=1 // pred_region
      _
    $region61: #{bert_encoder_forward.1} parent=1 // pred_fallthru
      _
    // Predicated region
    $region62: #{bert_encoder_forward.1} parent=1 // pred_check
      _
    $region63: #{bert_encoder_forward.1} parent=1 // pred_check_branch
      %56 = sbr.rel (0) target = $region65
    $region64: #{bert_encoder_forward.1} parent=1 // pred_region
      _
    $region65: #{bert_encoder_forward.1} parent=1 // pred_fallthru
      _
    // Predicated region
    $region66: #{bert_encoder_forward.1} parent=1 // pred_check
      _
    $region67: #{bert_encoder_forward.1} parent=1 // pred_check_branch
      %58 = sbr.rel (0) target = $region69
    $region68: #{bert_encoder_forward.1} parent=1 // pred_region
      _
    $region69: #{bert_encoder_forward.1} parent=1 // pred_fallthru
      _
    // Predicated region
    $region70: #{bert_encoder_forward.1} parent=1 // pred_check
      _
    $region71: #{bert_encoder_forward.1} parent=1 // pred_check_branch
      %60 = sbr.rel (0) target = $region73
    $region72: #{bert_encoder_forward.1} parent=1 // pred_region
      _
    $region73: #{bert_encoder_forward.1} parent=1 // pred_fallthru
      _
    // Predicated region
    $region74: #{bert_encoder_forward.1} parent=1 // pred_check
      _
    $region75: #{bert_encoder_forward.1} parent=1 // pred_check_branch
      %62 = sbr.rel (0) target = $region77
    $region76: #{bert_encoder_forward.1} parent=1 // pred_region
      _
    $region77: #{bert_encoder_forward.1} parent=1 // pred_fallthru
      _
    %v64 = vld [vmem:[%s1] sm:$0x1]
    %v65 = vld [vmem:[%s1 + $0x1] sm:$0x1]
    %v66 = vsub.f32 1.0, %v64
    %v67 = vsub.f32 1.0, %v65
    %v68 = vmul.f32 %v66, -10000.0
    %v69 = vmul.f32 %v67, -10000.0
    %v70 = vld [vmem:[%s0] sm:$0xff]
    %v71 = vld [vmem:[%s0 + $0x8] sm:$0xff]
    %v72 = vlaneseq
    %v73 = vand.u32 %v72, 127
    %74 = vset.pattern.permute.xlu0 0
    %75 = vperm.xlu0 %74, %v70
    %v76 = vpop.permute.xlu0 %75
    %77 = vset.pattern.permute.xlu0 0
    %78 = vperm.xlu0 %77, %v71
    %v79 = vpop.permute.xlu0 %78
    %vm80 = vcmp.eq.s32.totalorder %v73, %v76
    %vm81 = vcmp.eq.s32.totalorder %v73, %v79
    %v82 = vsel %vm80, 1, 0
    %v83 = vsel %vm81, 1, 0
    %v84 = vcvt.s32.f32 %v82
    %v85 = vcvt.s32.f32 %v83
    %v86 = vpack.c.bf16 %v85, %v84
    %v87 = vld [vmem:[%s2] sm:$0xf]
    %v88 = vld [vmem:[%s2 + $0x4] sm:$0xf]
    %v89 = vld [vmem:[%s2 + $0x8] sm:$0xf]
    %v90 = vld [vmem:[%s2 + $0xc] sm:$0xf]
    %v91 = vld [vmem:[%s2 + $0x10] sm:$0xf]
    %v92 = vld [vmem:[%s2 + $0x14] sm:$0xf]
    %v93 = vld [vmem:[%s2 + $0x18] sm:$0xf]
    %v94 = vld [vmem:[%s2 + $0x1c] sm:$0xf]
    %v95 = vld [vmem:[%s2 + $0x20] sm:$0xf]
    %v96 = vld [vmem:[%s2 + $0x24] sm:$0xf]
    %v97 = vld [vmem:[%s2 + $0x28] sm:$0xf]
    %v98 = vld [vmem:[%s2 + $0x2c] sm:$0xf]
    %v99 = vld [vmem:[%s2 + $0x30] sm:$0xf]
    %v100 = vld [vmem:[%s2 + $0x34] sm:$0xf]
    %v101 = vld [vmem:[%s2 + $0x38] sm:$0xf]
    %v102 = vld [vmem:[%s2 + $0x3c] sm:$0xf]
    %v103 = vld [vmem:[%s3] sm:$0xff]
    %v120 = vunpack.c.l.b16 %v87
    %v121 = vunpack.c.l.b16 %v88
    %v122 = vunpack.c.l.b16 %v89
    %v123 = vunpack.c.l.b16 %v90
    %v124 = vunpack.c.l.b16 %v91
    %v125 = vunpack.c.l.b16 %v92
    %v126 = vunpack.c.l.b16 %v93
    %v127 = vunpack.c.l.b16 %v94
    %v128 = vunpack.c.l.b16 %v95
    %v129 = vunpack.c.l.b16 %v96
    %v130 = vunpack.c.l.b16 %v97
    %v131 = vunpack.c.l.b16 %v98
    %v132 = vunpack.c.l.b16 %v99
    %v133 = vunpack.c.l.b16 %v100
    %v134 = vunpack.c.l.b16 %v101
    %v135 = vunpack.c.l.b16 %v102
    %v136 = vpack.c.b16 %v121, %v120
    %v137 = vpack.c.b16 %v123, %v122
    %v138 = vpack.c.b16 %v125, %v124
    %v139 = vpack.c.b16 %v127, %v126
    %v140 = vpack.c.b16 %v129, %v128
    %v141 = vpack.c.b16 %v131, %v130
    %v142 = vpack.c.b16 %v133, %v132
    %v143 = vpack.c.b16 %v135, %v134
    %152 = vmatpush.bf16.msra.mxu0 %v143
    %153 = vmatpush.bf16.msra.mxu0 %v142
    %154 = vmatpush.bf16.msra.mxu0 %v141
    %155 = vmatpush.bf16.msra.mxu0 %v140
    %156 = vmatpush.bf16.msra.mxu0 %v139
    %157 = vmatpush.bf16.msra.mxu0 %v138
    %158 = vmatpush.bf16.msra.mxu0 %v137
    %159 = vmatpush.bf16.msra.mxu0 %v136
    %160 = vmatmul.bf16.gmra.mxu0 %v86
    %v161 = vpop.f32.mrf.mxu0
    %v162 = vadd.f32 %v103, %v161
    %v163 = vpop.f32.mrf.mxu0
    %v164 = vadd.f32 %v103, %v163
    %165 = vdwg.mxu0
    %v166 = vld [vmem:[%s4] sm:$0x3]
    %v167 = vperm.slane %v166, 0
    %v168 = vadd.f32 %v162, %v167
    %v169 = vadd.f32 %v164, %v167
    %v170 = vld [vmem:[%s5] sm:$0x1]
    %v171 = vld [vmem:[%s6] sm:$0x1]
    %vm172 = vcmask 261120
    %v173 = vsel %vm172, %v168, 0.0
    %174 = vadd.xlane.f32.xlu0 %v173
    %v175 = vpop.xlane.xlu0 %174
    %v176 = vsel %vm172, %v169, 0.0
    %177 = vadd.xlane.f32.xlu0 %v176
    %v178 = vpop.xlane.xlu0 %177
    %v179 = vrcp.pop 32.0
    %v180 = vmul.f32 32.0, %v179
    %v181 = vsub.f32 1.0, %v180
    %v182 = vmul.f32 %v179, %v181
    %v183 = vadd.f32 %v179, %v182
    %vm184 = vweird.f32 %v179
    %v185 = vsel %vm184, %v179, %v183
    %v186 = vmul.f32 %v175, %v185
    %v187 = vmul.f32 %v178, %v185
    %v188 = vsub.f32 %v168, %v186
    %v189 = vsub.f32 %v169, %v187
    %v190 = vmul.f32 %v188, %v188
    %v191 = vmul.f32 %v189, %v189
    %v192 = vsel %vm172, %v190, 0.0
    %193 = vadd.xlane.f32.xlu0 %v192
    %v194 = vpop.xlane.xlu0 %193
    %v195 = vsel %vm172, %v191, 0.0
    %196 = vadd.xlane.f32.xlu0 %v195
    %v197 = vpop.xlane.xlu0 %196
    %v198 = vmul.f32 %v194, %v185
    %v199 = vmul.f32 %v197, %v185
    %v200 = vadd.f32 %v198, 1e-12
    %v201 = vadd.f32 %v199, 1e-12
    %v202 = vrsqrt.pop %v200
    %v203 = vmul.f32 %v202, %v200
    %v204 = vmul.f32 %v203, %v202
    %v205 = vmul.f32 0.5, %v204
    %v206 = vsub.f32 1.5, %v205
    %v207 = vmul.f32 %v202, %v206
    %vm208 = vweird.f32 %v200
    %vm209 = vweird.f32 %v202
    %vm210 = vmor %vm208, %vm209
    %v211 = vsel %vm210, %v202, %v207
    %v212 = vrsqrt.pop %v201
    %v213 = vmul.f32 %v212, %v201
    %v214 = vmul.f32 %v213, %v212
    %v215 = vmul.f32 0.5, %v214
    %v216 = vsub.f32 1.5, %v215
    %v217 = vmul.f32 %v212, %v216
    %vm218 = vweird.f32 %v201
    %vm219 = vweird.f32 %v212
    %vm220 = vmor %vm218, %vm219
    %v221 = vsel %vm220, %v212, %v217
    %v222 = vmul.f32 %v188, %v211
    %v223 = vmul.f32 %v189, %v221
    %v225 = vperm.slane %v170, 0
    %v227 = vmul.f32 %v222, %v225
    %v228 = vmul.f32 %v223, %v225
    %v230 = vperm.slane %v171, 0
    %v232 = vadd.f32 %v227, %v230
    %v233 = vadd.f32 %v228, %v230
    %v234 = vld [vmem:[%s7] sm:$0xf]
    %v235 = vld [vmem:[%s7 + $0x4] sm:$0xf]
    %v236 = vld [vmem:[%s7 + $0x8] sm:$0xf]
    %v237 = vld [vmem:[%s7 + $0xc] sm:$0xf]
    %v238 = vld [vmem:[%s8] sm:$0x1]
    %v239 = vpack.c.bf16 %v233, %v232
    %v241 = vperm.slane %v238, 0
    %v247 = vunpack.c.l.b16 %v234
    %v248 = vunpack.c.l.b16 %v235
    %v249 = vunpack.c.l.b16 %v236
    %v250 = vunpack.c.l.b16 %v237
    %v251 = vpack.c.b16 %v248, %v247
    %v252 = vpack.c.b16 %v250, %v249
    %v256 = vsel %vm172, %v239, 0
    %258 = vmatpush.bf16.msra.mxu0 0
    %259 = vmatpush.bf16.msra.mxu0 0
    %260 = vmatpush.bf16.msra.mxu0 0
    %261 = vmatpush.bf16.msra.mxu0 0
    %262 = vmatpush.bf16.msra.mxu0 0
    %263 = vmatpush.bf16.msra.mxu0 0
    %264 = vmatpush.bf16.msra.mxu0 %v252
    %265 = vmatpush.bf16.msra.mxu0 %v251
    %266 = vmatmul.bf16.gmra.mxu0 %v256
    %v267 = vpop.f32.mrf.mxu0
    %v268 = vadd.f32 %v241, %v267
    %v269 = vpop.f32.mrf.mxu0
    %v270 = vadd.f32 %v241, %v269
    %271 = vdwg.mxu0
    %v272 = vpack.c.bf16 %v268, %v268
    %v273 = vpack.c.bf16 %v270, %v270
    %v275 = vunpack.c.l.b16 %v272
    %v276 = vpack.c.b16 %v275, %v275
    %277 = vrot.lane.b32.xlu0 %v276, 96
    %v278 = vpop.permute.xlu0 %277
    %vm279 = vcmask 130048
    %v281 = vsel %vm279, %v272, 0
    %v284 = vsel %vm279, %v278, 0
    %286 = vmatpush.bf16.xpose.msra.mxu0 0
    %287 = vmatpush.bf16.xpose.msra.mxu0 0
    %288 = vmatpush.bf16.xpose.msra.mxu0 0
    %289 = vmatpush.bf16.xpose.msra.mxu0 0
    %290 = vmatpush.bf16.xpose.msra.mxu0 0
    %291 = vmatpush.bf16.xpose.msra.mxu0 0
    %292 = vmatpush.bf16.xpose.msra.mxu0 0
    %293 = vmatpush.bf16.xpose.msra.mxu0 %v284
    %294 = vmatmul.bf16.gmra.mxu0 %v281
    %v295 = vpop.f32.mrf.mxu0
    %v296 = vadd.f32 0.0, %v295
    %v297 = vpop.f32.mrf.mxu0
    %298 = vdwg.mxu0
    %v300 = vunpack.c.l.b16 %v273
    %v301 = vpack.c.b16 %v300, %v300
    %302 = vrot.lane.b32.xlu0 %v301, 96
    %v303 = vpop.permute.xlu0 %302
    %v305 = vsel %vm279, %v273, 0
    %v308 = vsel %vm279, %v303, 0
    %310 = vmatpush.bf16.xpose.msra.mxu0 0
    %311 = vmatpush.bf16.xpose.msra.mxu0 0
    %312 = vmatpush.bf16.xpose.msra.mxu0 0
    %313 = vmatpush.bf16.xpose.msra.mxu0 0
    %314 = vmatpush.bf16.xpose.msra.mxu0 0
    %315 = vmatpush.bf16.xpose.msra.mxu0 0
    %316 = vmatpush.bf16.xpose.msra.mxu0 0
    %317 = vmatpush.bf16.xpose.msra.mxu0 %v308
    %318 = vmatmul.bf16.gmra.mxu0 %v305
    %v319 = vpop.f32.mrf.mxu0
    %v320 = vadd.f32 0.0, %v319
    %v321 = vpop.f32.mrf.mxu0
    %322 = vdwg.mxu0
    %v323 = vmul.f32 %v296, 0.25
    %v324 = vmul.f32 %v320, 0.25
    %v327 = vperm.slane %v68, 0
    %v328 = vperm.slane %v69, 0
    %v331 = vadd.f32 %v323, %v327
    %v332 = vadd.f32 %v324, %v328
    %vm333 = vcmask 64512
    %v334 = vsel %vm333, %v331, -inf
    %335 = vmax.xlane.f32.xlu0 %v334
    %v336 = vpop.xlane.xlu0 %335
    %v337 = vsel %vm333, %v332, -inf
    %338 = vmax.xlane.f32.xlu0 %v337
    %v339 = vpop.xlane.xlu0 %338
    %v340 = vsub.f32 %v331, %v336
    %v341 = vsub.f32 %v332, %v339
    %v342 = vmul.f32 %v340, 1.442695
    %v343 = vpow.pop %v342
    %v344 = vmul.f32 %v341, 1.442695
    %v345 = vpow.pop %v344
    %v346 = vsel %vm333, %v343, 0.0
    %347 = vadd.xlane.f32.xlu0 %v346
    %v348 = vpop.xlane.xlu0 %347
    %v349 = vsel %vm333, %v345, 0.0
    %350 = vadd.xlane.f32.xlu0 %v349
    %v351 = vpop.xlane.xlu0 %350
    %v352 = vrcp.pop %v348
    %v353 = vrcp.pop %v351
    %v354 = vmul.f32 %v343, %v352
    %v355 = vmul.f32 %v345, %v353
    %v356 = vpack.c.bf16 %v354, %v354
    %v357 = vpack.c.bf16 %v355, %v355
    %358 = vrot.lane.b32.xlu0 %v276, 64
    %v359 = vpop.permute.xlu0 %358
    %v361 = vsel %vm333, %v356, 0
    %vm363 = vcmask 1043456
    %v365 = vsel %vm363, %v359, 0
    %367 = vmatpush.bf16.msra.mxu0 0
    %368 = vmatpush.bf16.msra.mxu0 0
    %369 = vmatpush.bf16.msra.mxu0 0
    %370 = vmatpush.bf16.msra.mxu0 0
    %371 = vmatpush.bf16.msra.mxu0 0
    %372 = vmatpush.bf16.msra.mxu0 0
    %373 = vmatpush.bf16.msra.mxu0 0
    %374 = vmatpush.bf16.msra.mxu0 %v365
    %375 = vmatmul.bf16.gmra.mxu0 %v361
    %v376 = vpop.f32.mrf.mxu0
    %v377 = vadd.f32 0.0, %v376
    %v378 = vpop.f32.mrf.mxu0
    %379 = vdwg.mxu0
    %380 = vrot.lane.b32.xlu0 %v301, 64
    %v381 = vpop.permute.xlu0 %380
    %v383 = vsel %vm333, %v357, 0
    %v386 = vsel %vm363, %v381, 0
    %388 = vmatpush.bf16.msra.mxu0 0
    %389 = vmatpush.bf16.msra.mxu0 0
    %390 = vmatpush.bf16.msra.mxu0 0
    %391 = vmatpush.bf16.msra.mxu0 0
    %392 = vmatpush.bf16.msra.mxu0 0
    %393 = vmatpush.bf16.msra.mxu0 0
    %394 = vmatpush.bf16.msra.mxu0 0
    %395 = vmatpush.bf16.msra.mxu0 %v386
    %396 = vmatmul.bf16.gmra.mxu0 %v383
    %v397 = vpop.f32.mrf.mxu0
    %v398 = vadd.f32 0.0, %v397
    %v399 = vpop.f32.mrf.mxu0
    %400 = vdwg.mxu0
    %401 = vrot.lane.b32.xlu0 %v276, 112
    %v402 = vpop.permute.xlu0 %401
    %403 = vrot.lane.b32.xlu0 %v276, 80
    %v404 = vpop.permute.xlu0 %403
    %v406 = vsel %vm279, %v402, 0
    %v409 = vsel %vm279, %v404, 0
    %411 = vmatpush.bf16.xpose.msra.mxu0 0
    %412 = vmatpush.bf16.xpose.msra.mxu0 0
    %413 = vmatpush.bf16.xpose.msra.mxu0 0
    %414 = vmatpush.bf16.xpose.msra.mxu0 0
    %415 = vmatpush.bf16.xpose.msra.mxu0 0
    %416 = vmatpush.bf16.xpose.msra.mxu0 0
    %417 = vmatpush.bf16.xpose.msra.mxu0 0
    %418 = vmatpush.bf16.xpose.msra.mxu0 %v409
    %419 = vmatmul.bf16.gmra.mxu0 %v406
    %v420 = vpop.f32.mrf.mxu0
    %v421 = vadd.f32 0.0, %v420
    %v422 = vpop.f32.mrf.mxu0
    %423 = vdwg.mxu0
    %424 = vrot.lane.b32.xlu0 %v301, 112
    %v425 = vpop.permute.xlu0 %424
    %426 = vrot.lane.b32.xlu0 %v301, 80
    %v427 = vpop.permute.xlu0 %426
    %v429 = vsel %vm279, %v425, 0
    %v432 = vsel %vm279, %v427, 0
    %434 = vmatpush.bf16.xpose.msra.mxu0 0
    %435 = vmatpush.bf16.xpose.msra.mxu0 0
    %436 = vmatpush.bf16.xpose.msra.mxu0 0
    %437 = vmatpush.bf16.xpose.msra.mxu0 0
    %438 = vmatpush.bf16.xpose.msra.mxu0 0
    %439 = vmatpush.bf16.xpose.msra.mxu0 0
    %440 = vmatpush.bf16.xpose.msra.mxu0 0
    %441 = vmatpush.bf16.xpose.msra.mxu0 %v432
    %442 = vmatmul.bf16.gmra.mxu0 %v429
    %v443 = vpop.f32.mrf.mxu0
    %v444 = vadd.f32 0.0, %v443
    %v445 = vpop.f32.mrf.mxu0
    %446 = vdwg.mxu0
    %v447 = vmul.f32 %v421, 0.25
    %v448 = vmul.f32 %v444, 0.25
    %v449 = vadd.f32 %v447, %v327
    %v450 = vadd.f32 %v448, %v328
    %v451 = vsel %vm333, %v449, -inf
    %452 = vmax.xlane.f32.xlu0 %v451
    %v453 = vpop.xlane.xlu0 %452
    %v454 = vsel %vm333, %v450, -inf
    %455 = vmax.xlane.f32.xlu0 %v454
    %v456 = vpop.xlane.xlu0 %455
    %v457 = vsub.f32 %v449, %v453
    %v458 = vsub.f32 %v450, %v456
    %v459 = vmul.f32 %v457, 1.442695
    %v460 = vpow.pop %v459
    %v461 = vmul.f32 %v458, 1.442695
    %v462 = vpow.pop %v461
    %v463 = vsel %vm333, %v460, 0.0
    %464 = vadd.xlane.f32.xlu0 %v463
    %v465 = vpop.xlane.xlu0 %464
    %v466 = vsel %vm333, %v462, 0.0
    %467 = vadd.xlane.f32.xlu0 %v466
    %v468 = vpop.xlane.xlu0 %467
    %v469 = vrcp.pop %v465
    %v470 = vrcp.pop %v468
    %v471 = vmul.f32 %v460, %v469
    %v472 = vmul.f32 %v462, %v470
    %v473 = vpack.c.bf16 %v471, %v471
    %v474 = vpack.c.bf16 %v472, %v472
    %475 = vrot.lane.b32.xlu0 %v276, 48
    %v476 = vpop.permute.xlu0 %475
    %v478 = vsel %vm333, %v473, 0
    %v481 = vsel %vm363, %v476, 0
    %483 = vmatpush.bf16.msra.mxu0 0
    %484 = vmatpush.bf16.msra.mxu0 0
    %485 = vmatpush.bf16.msra.mxu0 0
    %486 = vmatpush.bf16.msra.mxu0 0
    %487 = vmatpush.bf16.msra.mxu0 0
    %488 = vmatpush.bf16.msra.mxu0 0
    %489 = vmatpush.bf16.msra.mxu0 0
    %490 = vmatpush.bf16.msra.mxu0 %v481
    %491 = vmatmul.bf16.gmra.mxu0 %v478
    %v492 = vpop.f32.mrf.mxu0
    %v493 = vadd.f32 0.0, %v492
    %v494 = vpop.f32.mrf.mxu0
    %495 = vdwg.mxu0
    %496 = vrot.lane.b32.xlu0 %v301, 48
    %v497 = vpop.permute.xlu0 %496
    %v499 = vsel %vm333, %v474, 0
    %v502 = vsel %vm363, %v497, 0
    %504 = vmatpush.bf16.msra.mxu0 0
    %505 = vmatpush.bf16.msra.mxu0 0
    %506 = vmatpush.bf16.msra.mxu0 0
    %507 = vmatpush.bf16.msra.mxu0 0
    %508 = vmatpush.bf16.msra.mxu0 0
    %509 = vmatpush.bf16.msra.mxu0 0
    %510 = vmatpush.bf16.msra.mxu0 0
    %511 = vmatpush.bf16.msra.mxu0 %v502
    %512 = vmatmul.bf16.gmra.mxu0 %v499
    %v513 = vpop.f32.mrf.mxu0
    %v514 = vadd.f32 0.0, %v513
    %v515 = vpop.f32.mrf.mxu0
    %516 = vdwg.mxu0
    %519 = vrot.lane.b32.xlu0 %v493, 16
    %v520 = vpop.permute.xlu0 %519
    %521 = vrot.lane.b32.xlu0 %v514, 16
    %v522 = vpop.permute.xlu0 %521
    %v525 = vsel %vm279, %v377, %v520
    %v526 = vsel %vm279, %v398, %v522
    %v527 = vld [vmem:[%s9] sm:$0xf]
    %v528 = vld [vmem:[%s9 + $0x4] sm:$0xf]
    %v529 = vld [vmem:[%s9 + $0x8] sm:$0xf]
    %v530 = vld [vmem:[%s9 + $0xc] sm:$0xf]
    %v531 = vld [vmem:[%s10] sm:$0x1]
    %v532 = vpack.c.bf16 %v526, %v525
    %v534 = vperm.slane %v531, 0
    %v540 = vunpack.c.l.b16 %v527
    %v541 = vunpack.c.l.b16 %v528
    %v542 = vunpack.c.l.b16 %v529
    %v543 = vunpack.c.l.b16 %v530
    %v544 = vpack.c.b16 %v541, %v540
    %v545 = vpack.c.b16 %v543, %v542
    %v549 = vsel %vm172, %v532, 0
    %551 = vmatpush.bf16.msra.mxu0 0
    %552 = vmatpush.bf16.msra.mxu0 0
    %553 = vmatpush.bf16.msra.mxu0 0
    %554 = vmatpush.bf16.msra.mxu0 0
    %555 = vmatpush.bf16.msra.mxu0 0
    %556 = vmatpush.bf16.msra.mxu0 0
    %557 = vmatpush.bf16.msra.mxu0 %v545
    %558 = vmatpush.bf16.msra.mxu0 %v544
    %559 = vmatmul.bf16.gmra.mxu0 %v549
    %v560 = vpop.f32.mrf.mxu0
    %v561 = vadd.f32 %v534, %v560
    %v562 = vpop.f32.mrf.mxu0
    %v563 = vadd.f32 %v534, %v562
    %564 = vdwg.mxu0
    %v565 = vadd.f32 %v561, %v232
    %v566 = vadd.f32 %v563, %v233
    %v567 = vld [vmem:[%s11] sm:$0x1]
    %v568 = vld [vmem:[%s12] sm:$0x1]
    %v569 = vsel %vm172, %v565, 0.0
    %570 = vadd.xlane.f32.xlu0 %v569
    %v571 = vpop.xlane.xlu0 %570
    %v572 = vsel %vm172, %v566, 0.0
    %573 = vadd.xlane.f32.xlu0 %v572
    %v574 = vpop.xlane.xlu0 %573
    %v575 = vmul.f32 %v571, %v185
    %v576 = vmul.f32 %v574, %v185
    %v577 = vsub.f32 %v565, %v575
    %v578 = vsub.f32 %v566, %v576
    %v579 = vmul.f32 %v577, %v577
    %v580 = vmul.f32 %v578, %v578
    %v581 = vsel %vm172, %v579, 0.0
    %582 = vadd.xlane.f32.xlu0 %v581
    %v583 = vpop.xlane.xlu0 %582
    %v584 = vsel %vm172, %v580, 0.0
    %585 = vadd.xlane.f32.xlu0 %v584
    %v586 = vpop.xlane.xlu0 %585
    %v587 = vmul.f32 %v583, %v185
    %v588 = vmul.f32 %v586, %v185
    %v589 = vadd.f32 %v587, 1e-12
    %v590 = vadd.f32 %v588, 1e-12
    %v591 = vrsqrt.pop %v589
    %v592 = vmul.f32 %v591, %v589
    %v593 = vmul.f32 %v592, %v591
    %v594 = vmul.f32 0.5, %v593
    %v595 = vsub.f32 1.5, %v594
    %v596 = vmul.f32 %v591, %v595
    %vm597 = vweird.f32 %v589
    %vm598 = vweird.f32 %v591
    %vm599 = vmor %vm597, %vm598
    %v600 = vsel %vm599, %v591, %v596
    %v601 = vrsqrt.pop %v590
    %v602 = vmul.f32 %v601, %v590
    %v603 = vmul.f32 %v602, %v601
    %v604 = vmul.f32 0.5, %v603
    %v605 = vsub.f32 1.5, %v604
    %v606 = vmul.f32 %v601, %v605
    %vm607 = vweird.f32 %v590
    %vm608 = vweird.f32 %v601
    %vm609 = vmor %vm607, %vm608
    %v610 = vsel %vm609, %v601, %v606
    %v611 = vmul.f32 %v577, %v600
    %v612 = vmul.f32 %v578, %v610
    %v614 = vperm.slane %v567, 0
    %v616 = vmul.f32 %v611, %v614
    %v617 = vmul.f32 %v612, %v614
    %v619 = vperm.slane %v568, 0
    %v621 = vadd.f32 %v616, %v619
    %v622 = vadd.f32 %v617, %v619
    %v623 = vld [vmem:[%s13] sm:$0xf]
    %v624 = vld [vmem:[%s13 + $0x4] sm:$0xf]
    %v625 = vld [vmem:[%s13 + $0x8] sm:$0xf]
    %v626 = vld [vmem:[%s13 + $0xc] sm:$0xf]
    %v627 = vld [vmem:[%s14] sm:$0x1]
    %v628 = vpack.c.bf16 %v622, %v621
    %v630 = vperm.slane %v627, 0
    %v636 = vunpack.c.l.b16 %v623
    %v637 = vunpack.c.l.b16 %v624
    %v638 = vunpack.c.l.b16 %v625
    %v639 = vunpack.c.l.b16 %v626
    %v640 = vpack.c.b16 %v637, %v636
    %v641 = vpack.c.b16 %v639, %v638
    %v645 = vsel %vm172, %v628, 0
    %647 = vmatpush.bf16.msra.mxu0 0
    %648 = vmatpush.bf16.msra.mxu0 0
    %649 = vmatpush.bf16.msra.mxu0 0
    %650 = vmatpush.bf16.msra.mxu0 0
    %651 = vmatpush.bf16.msra.mxu0 0
    %652 = vmatpush.bf16.msra.mxu0 0
    %653 = vmatpush.bf16.msra.mxu0 %v641
    %654 = vmatpush.bf16.msra.mxu0 %v640
    %655 = vmatmul.bf16.gmra.mxu0 %v645
    %v656 = vpop.f32.mrf.mxu0
    %v657 = vadd.f32 %v630, %v656
    %v658 = vpop.f32.mrf.mxu0
    %v659 = vadd.f32 %v630, %v658
    %660 = vdwg.mxu0
    %v661 = vmul.f32 %v657, 0.5
    %v662 = vmul.f32 %v659, 0.5
    %v663 = vmul.f32 %v657, 0.044715
    %v664 = vmul.f32 %v659, 0.044715
    %v665 = vmul.f32 %v663, %v657
    %v666 = vmul.f32 %v664, %v659
    %v667 = vmul.f32 %v665, %v657
    %v668 = vmul.f32 %v666, %v659
    %v669 = vadd.f32 %v657, %v667
    %v670 = vadd.f32 %v659, %v668
    %v671 = vmul.f32 %v669, 0.7978846
    %v672 = vmul.f32 %v670, 0.7978846
    %v673 = vtanh.pop %v671
    %v674 = vtanh.pop %v672
    %v675 = vadd.f32 %v673, 1.0
    %v676 = vadd.f32 %v674, 1.0
    %v677 = vmul.f32 %v661, %v675
    %v678 = vmul.f32 %v662, %v676
    %v679 = vld [vmem:[%s15] sm:$0xf]
    %v680 = vld [vmem:[%s15 + $0x4] sm:$0xf]
    %v681 = vld [vmem:[%s15 + $0x8] sm:$0xf]
    %v682 = vld [vmem:[%s15 + $0xc] sm:$0xf]
    %v683 = vld [vmem:[%s15 + $0x10] sm:$0xf]
    %v684 = vld [vmem:[%s15 + $0x14] sm:$0xf]
    %v685 = vld [vmem:[%s15 + $0x18] sm:$0xf]
    %v686 = vld [vmem:[%s15 + $0x1c] sm:$0xf]
    %v687 = vld [vmem:[%s15 + $0x20] sm:$0xf]
    %v688 = vld [vmem:[%s15 + $0x24] sm:$0xf]
    %v689 = vld [vmem:[%s15 + $0x28] sm:$0xf]
    %v690 = vld [vmem:[%s15 + $0x2c] sm:$0xf]
    %v691 = vld [vmem:[%s15 + $0x30] sm:$0xf]
    %v692 = vld [vmem:[%s15 + $0x34] sm:$0xf]
    %v693 = vld [vmem:[%s15 + $0x38] sm:$0xf]
    %v694 = vld [vmem:[%s15 + $0x3c] sm:$0xf]
    %v695 = vld [vmem:[%s16] sm:$0x1]
    %v696 = vpack.c.bf16 %v678, %v677
    %v698 = vperm.slane %v695, 0
    %v716 = vunpack.c.l.b16 %v679
    %v717 = vunpack.c.l.b16 %v680
    %v718 = vunpack.c.l.b16 %v681
    %v719 = vunpack.c.l.b16 %v682
    %v720 = vunpack.c.l.b16 %v683
    %v721 = vunpack.c.l.b16 %v684
    %v722 = vunpack.c.l.b16 %v685
    %v723 = vunpack.c.l.b16 %v686
    %v724 = vunpack.c.l.b16 %v687
    %v725 = vunpack.c.l.b16 %v688
    %v726 = vunpack.c.l.b16 %v689
    %v727 = vunpack.c.l.b16 %v690
    %v728 = vunpack.c.l.b16 %v691
    %v729 = vunpack.c.l.b16 %v692
    %v730 = vunpack.c.l.b16 %v693
    %v731 = vunpack.c.l.b16 %v694
    %v732 = vpack.c.b16 %v717, %v716
    %v733 = vpack.c.b16 %v719, %v718
    %v734 = vpack.c.b16 %v721, %v720
    %v735 = vpack.c.b16 %v723, %v722
    %v736 = vpack.c.b16 %v725, %v724
    %v737 = vpack.c.b16 %v727, %v726
    %v738 = vpack.c.b16 %v729, %v728
    %v739 = vpack.c.b16 %v731, %v730
    %748 = vmatpush.bf16.msra.mxu0 %v739
    %749 = vmatpush.bf16.msra.mxu0 %v738
    %750 = vmatpush.bf16.msra.mxu0 %v737
    %751 = vmatpush.bf16.msra.mxu0 %v736
    %752 = vmatpush.bf16.msra.mxu0 %v735
    %753 = vmatpush.bf16.msra.mxu0 %v734
    %754 = vmatpush.bf16.msra.mxu0 %v733
    %755 = vmatpush.bf16.msra.mxu0 %v732
    %756 = vmatmul.bf16.gmra.mxu0 %v696
    %v757 = vpop.f32.mrf.mxu0
    %v758 = vadd.f32 %v698, %v757
    %v759 = vpop.f32.mrf.mxu0
    %v760 = vadd.f32 %v698, %v759
    %761 = vdwg.mxu0
    %v762 = vadd.f32 %v758, %v621
    %v763 = vadd.f32 %v760, %v622
    %v764 = vld [vmem:[%s17] sm:$0x1]
    %v765 = vld [vmem:[%s18] sm:$0x1]
    %v766 = vsel %vm172, %v762, 0.0
    %767 = vadd.xlane.f32.xlu0 %v766
    %v768 = vpop.xlane.xlu0 %767
    %v769 = vsel %vm172, %v763, 0.0
    %770 = vadd.xlane.f32.xlu0 %v769
    %v771 = vpop.xlane.xlu0 %770
    %v772 = vmul.f32 %v768, %v185
    %v773 = vmul.f32 %v771, %v185
    %v774 = vsub.f32 %v762, %v772
    %v775 = vsub.f32 %v763, %v773
    %v776 = vmul.f32 %v774, %v774
    %v777 = vmul.f32 %v775, %v775
    %v778 = vsel %vm172, %v776, 0.0
    %779 = vadd.xlane.f32.xlu0 %v778
    %v780 = vpop.xlane.xlu0 %779
    %v781 = vsel %vm172, %v777, 0.0
    %782 = vadd.xlane.f32.xlu0 %v781
    %v783 = vpop.xlane.xlu0 %782
    %v784 = vmul.f32 %v780, %v185
    %v785 = vmul.f32 %v783, %v185
    %v786 = vadd.f32 %v784, 1e-12
    %v787 = vadd.f32 %v785, 1e-12
    %v788 = vrsqrt.pop %v786
    %v789 = vmul.f32 %v788, %v786
    %v790 = vmul.f32 %v789, %v788
    %v791 = vmul.f32 0.5, %v790
    %v792 = vsub.f32 1.5, %v791
    %v793 = vmul.f32 %v788, %v792
    %vm794 = vweird.f32 %v786
    %vm795 = vweird.f32 %v788
    %vm796 = vmor %vm794, %vm795
    %v797 = vsel %vm796, %v788, %v793
    %v798 = vrsqrt.pop %v787
    %v799 = vmul.f32 %v798, %v787
    %v800 = vmul.f32 %v799, %v798
    %v801 = vmul.f32 0.5, %v800
    %v802 = vsub.f32 1.5, %v801
    %v803 = vmul.f32 %v798, %v802
    %vm804 = vweird.f32 %v787
    %vm805 = vweird.f32 %v798
    %vm806 = vmor %vm804, %vm805
    %v807 = vsel %vm806, %v798, %v803
    %v808 = vmul.f32 %v774, %v797
    %v809 = vmul.f32 %v775, %v807
    %v811 = vperm.slane %v764, 0
    %v813 = vmul.f32 %v808, %v811
    %v814 = vmul.f32 %v809, %v811
    %v816 = vperm.slane %v765, 0
    %v818 = vadd.f32 %v813, %v816
    %v819 = vadd.f32 %v814, %v816
    %s820 = scalar_lea.vmem %s7, 16
    %v821 = vld [vmem:[%s820] sm:$0xf]
    %v822 = vld [vmem:[%s820 + $0x4] sm:$0xf]
    %v823 = vld [vmem:[%s820 + $0x8] sm:$0xf]
    %v824 = vld [vmem:[%s820 + $0xc] sm:$0xf]
    %s825 = scalar_lea.vmem %s8, 1
    %v826 = vld [vmem:[%s825] sm:$0x1]
    %v827 = vpack.c.bf16 %v819, %v818
    %v829 = vperm.slane %v826, 0
    %v835 = vunpack.c.l.b16 %v821
    %v836 = vunpack.c.l.b16 %v822
    %v837 = vunpack.c.l.b16 %v823
    %v838 = vunpack.c.l.b16 %v824
    %v839 = vpack.c.b16 %v836, %v835
    %v840 = vpack.c.b16 %v838, %v837
    %v844 = vsel %vm172, %v827, 0
    %846 = vmatpush.bf16.msra.mxu0 0
    %847 = vmatpush.bf16.msra.mxu0 0
    %848 = vmatpush.bf16.msra.mxu0 0
    %849 = vmatpush.bf16.msra.mxu0 0
    %850 = vmatpush.bf16.msra.mxu0 0
    %851 = vmatpush.bf16.msra.mxu0 0
    %852 = vmatpush.bf16.msra.mxu0 %v840
    %853 = vmatpush.bf16.msra.mxu0 %v839
    %854 = vmatmul.bf16.gmra.mxu0 %v844
    %v855 = vpop.f32.mrf.mxu0
    %v856 = vadd.f32 %v829, %v855
    %v857 = vpop.f32.mrf.mxu0
    %v858 = vadd.f32 %v829, %v857
    %859 = vdwg.mxu0
    %v860 = vpack.c.bf16 %v856, %v856
    %v861 = vpack.c.bf16 %v858, %v858
    %v863 = vunpack.c.l.b16 %v860
    %v864 = vpack.c.b16 %v863, %v863
    %865 = vrot.lane.b32.xlu0 %v864, 96
    %v866 = vpop.permute.xlu0 %865
    %v868 = vsel %vm279, %v860, 0
    %v871 = vsel %vm279, %v866, 0
    %873 = vmatpush.bf16.xpose.msra.mxu0 0
    %874 = vmatpush.bf16.xpose.msra.mxu0 0
    %875 = vmatpush.bf16.xpose.msra.mxu0 0
    %876 = vmatpush.bf16.xpose.msra.mxu0 0
    %877 = vmatpush.bf16.xpose.msra.mxu0 0
    %878 = vmatpush.bf16.xpose.msra.mxu0 0
    %879 = vmatpush.bf16.xpose.msra.mxu0 0
    %880 = vmatpush.bf16.xpose.msra.mxu0 %v871
    %881 = vmatmul.bf16.gmra.mxu0 %v868
    %v882 = vpop.f32.mrf.mxu0
    %v883 = vadd.f32 0.0, %v882
    %v884 = vpop.f32.mrf.mxu0
    %885 = vdwg.mxu0
    %v887 = vunpack.c.l.b16 %v861
    %v888 = vpack.c.b16 %v887, %v887
    %889 = vrot.lane.b32.xlu0 %v888, 96
    %v890 = vpop.permute.xlu0 %889
    %v892 = vsel %vm279, %v861, 0
    %v895 = vsel %vm279, %v890, 0
    %897 = vmatpush.bf16.xpose.msra.mxu0 0
    %898 = vmatpush.bf16.xpose.msra.mxu0 0
    %899 = vmatpush.bf16.xpose.msra.mxu0 0
    %900 = vmatpush.bf16.xpose.msra.mxu0 0
    %901 = vmatpush.bf16.xpose.msra.mxu0 0
    %902 = vmatpush.bf16.xpose.msra.mxu0 0
    %903 = vmatpush.bf16.xpose.msra.mxu0 0
    %904 = vmatpush.bf16.xpose.msra.mxu0 %v895
    %905 = vmatmul.bf16.gmra.mxu0 %v892
    %v906 = vpop.f32.mrf.mxu0
    %v907 = vadd.f32 0.0, %v906
    %v908 = vpop.f32.mrf.mxu0
    %909 = vdwg.mxu0
    %v910 = vmul.f32 %v883, 0.25
    %v911 = vmul.f32 %v907, 0.25
    %v912 = vadd.f32 %v910, %v327
    %v913 = vadd.f32 %v911, %v328
    %v914 = vsel %vm333, %v912, -inf
    %915 = vmax.xlane.f32.xlu0 %v914
    %v916 = vpop.xlane.xlu0 %915
    %v917 = vsel %vm333, %v913, -inf
    %918 = vmax.xlane.f32.xlu0 %v917
    %v919 = vpop.xlane.xlu0 %918
    %v920 = vsub.f32 %v912, %v916
    %v921 = vsub.f32 %v913, %v919
    %v922 = vmul.f32 %v920, 1.442695
    %v923 = vpow.pop %v922
    %v924 = vmul.f32 %v921, 1.442695
    %v925 = vpow.pop %v924
    %v926 = vsel %vm333, %v923, 0.0
    %927 = vadd.xlane.f32.xlu0 %v926
    %v928 = vpop.xlane.xlu0 %927
    %v929 = vsel %vm333, %v925, 0.0
    %930 = vadd.xlane.f32.xlu0 %v929
    %v931 = vpop.xlane.xlu0 %930
    %v932 = vrcp.pop %v928
    %v933 = vrcp.pop %v931
    %v934 = vmul.f32 %v923, %v932
    %v935 = vmul.f32 %v925, %v933
    %v936 = vpack.c.bf16 %v934, %v934
    %v937 = vpack.c.bf16 %v935, %v935
    %938 = vrot.lane.b32.xlu0 %v864, 64
    %v939 = vpop.permute.xlu0 %938
    %v941 = vsel %vm333, %v936, 0
    %v944 = vsel %vm363, %v939, 0
    %946 = vmatpush.bf16.msra.mxu0 0
    %947 = vmatpush.bf16.msra.mxu0 0
    %948 = vmatpush.bf16.msra.mxu0 0
    %949 = vmatpush.bf16.msra.mxu0 0
    %950 = vmatpush.bf16.msra.mxu0 0
    %951 = vmatpush.bf16.msra.mxu0 0
    %952 = vmatpush.bf16.msra.mxu0 0
    %953 = vmatpush.bf16.msra.mxu0 %v944
    %954 = vmatmul.bf16.gmra.mxu0 %v941
    %v955 = vpop.f32.mrf.mxu0
    %v956 = vadd.f32 0.0, %v955
    %v957 = vpop.f32.mrf.mxu0
    %958 = vdwg.mxu0
    %959 = vrot.lane.b32.xlu0 %v888, 64
    %v960 = vpop.permute.xlu0 %959
    %v962 = vsel %vm333, %v937, 0
    %v965 = vsel %vm363, %v960, 0
    %967 = vmatpush.bf16.msra.mxu0 0
    %968 = vmatpush.bf16.msra.mxu0 0
    %969 = vmatpush.bf16.msra.mxu0 0
    %970 = vmatpush.bf16.msra.mxu0 0
    %971 = vmatpush.bf16.msra.mxu0 0
    %972 = vmatpush.bf16.msra.mxu0 0
    %973 = vmatpush.bf16.msra.mxu0 0
    %974 = vmatpush.bf16.msra.mxu0 %v965
    %975 = vmatmul.bf16.gmra.mxu0 %v962
    %v976 = vpop.f32.mrf.mxu0
    %v977 = vadd.f32 0.0, %v976
    %v978 = vpop.f32.mrf.mxu0
    %979 = vdwg.mxu0
    %980 = vrot.lane.b32.xlu0 %v864, 112
    %v981 = vpop.permute.xlu0 %980
    %982 = vrot.lane.b32.xlu0 %v864, 80
    %v983 = vpop.permute.xlu0 %982
    %v985 = vsel %vm279, %v981, 0
    %v988 = vsel %vm279, %v983, 0
    %990 = vmatpush.bf16.xpose.msra.mxu0 0
    %991 = vmatpush.bf16.xpose.msra.mxu0 0
    %992 = vmatpush.bf16.xpose.msra.mxu0 0
    %993 = vmatpush.bf16.xpose.msra.mxu0 0
    %994 = vmatpush.bf16.xpose.msra.mxu0 0
    %995 = vmatpush.bf16.xpose.msra.mxu0 0
    %996 = vmatpush.bf16.xpose.msra.mxu0 0
    %997 = vmatpush.bf16.xpose.msra.mxu0 %v988
    %998 = vmatmul.bf16.gmra.mxu0 %v985
    %v999 = vpop.f32.mrf.mxu0
    %v1000 = vadd.f32 0.0, %v999
    %v1001 = vpop.f32.mrf.mxu0
    %1002 = vdwg.mxu0
    %1003 = vrot.lane.b32.xlu0 %v888, 112
    %v1004 = vpop.permute.xlu0 %1003
    %1005 = vrot.lane.b32.xlu0 %v888, 80
    %v1006 = vpop.permute.xlu0 %1005
    %v1008 = vsel %vm279, %v1004, 0
    %v1011 = vsel %vm279, %v1006, 0
    %1013 = vmatpush.bf16.xpose.msra.mxu0 0
    %1014 = vmatpush.bf16.xpose.msra.mxu0 0
    %1015 = vmatpush.bf16.xpose.msra.mxu0 0
    %1016 = vmatpush.bf16.xpose.msra.mxu0 0
    %1017 = vmatpush.bf16.xpose.msra.mxu0 0
    %1018 = vmatpush.bf16.xpose.msra.mxu0 0
    %1019 = vmatpush.bf16.xpose.msra.mxu0 0
    %1020 = vmatpush.bf16.xpose.msra.mxu0 %v1011
    %1021 = vmatmul.bf16.gmra.mxu0 %v1008
    %v1022 = vpop.f32.mrf.mxu0
    %v1023 = vadd.f32 0.0, %v1022
    %v1024 = vpop.f32.mrf.mxu0
    %1025 = vdwg.mxu0
    %v1026 = vmul.f32 %v1000, 0.25
    %v1027 = vmul.f32 %v1023, 0.25
    %v1028 = vadd.f32 %v1026, %v327
    %v1029 = vadd.f32 %v1027, %v328
    %v1030 = vsel %vm333, %v1028, -inf
    %1031 = vmax.xlane.f32.xlu0 %v1030
    %v1032 = vpop.xlane.xlu0 %1031
    %v1033 = vsel %vm333, %v1029, -inf
    %1034 = vmax.xlane.f32.xlu0 %v1033
    %v1035 = vpop.xlane.xlu0 %1034
    %v1036 = vsub.f32 %v1028, %v1032
    %v1037 = vsub.f32 %v1029, %v1035
    %v1038 = vmul.f32 %v1036, 1.442695
    %v1039 = vpow.pop %v1038
    %v1040 = vmul.f32 %v1037, 1.442695
    %v1041 = vpow.pop %v1040
    %v1042 = vsel %vm333, %v1039, 0.0
    %1043 = vadd.xlane.f32.xlu0 %v1042
    %v1044 = vpop.xlane.xlu0 %1043
    %v1045 = vsel %vm333, %v1041, 0.0
    %1046 = vadd.xlane.f32.xlu0 %v1045
    %v1047 = vpop.xlane.xlu0 %1046
    %v1048 = vrcp.pop %v1044
    %v1049 = vrcp.pop %v1047
    %v1050 = vmul.f32 %v1039, %v1048
    %v1051 = vmul.f32 %v1041, %v1049
    %v1052 = vpack.c.bf16 %v1050, %v1050
    %v1053 = vpack.c.bf16 %v1051, %v1051
    %1054 = vrot.lane.b32.xlu0 %v864, 48
    %v1055 = vpop.permute.xlu0 %1054
    %v1057 = vsel %vm333, %v1052, 0
    %v1060 = vsel %vm363, %v1055, 0
    %1062 = vmatpush.bf16.msra.mxu0 0
    %1063 = vmatpush.bf16.msra.mxu0 0
    %1064 = vmatpush.bf16.msra.mxu0 0
    %1065 = vmatpush.bf16.msra.mxu0 0
    %1066 = vmatpush.bf16.msra.mxu0 0
    %1067 = vmatpush.bf16.msra.mxu0 0
    %1068 = vmatpush.bf16.msra.mxu0 0
    %1069 = vmatpush.bf16.msra.mxu0 %v1060
    %1070 = vmatmul.bf16.gmra.mxu0 %v1057
    %v1071 = vpop.f32.mrf.mxu0
    %v1072 = vadd.f32 0.0, %v1071
    %v1073 = vpop.f32.mrf.mxu0
    %1074 = vdwg.mxu0
    %1075 = vrot.lane.b32.xlu0 %v888, 48
    %v1076 = vpop.permute.xlu0 %1075
    %v1078 = vsel %vm333, %v1053, 0
    %v1081 = vsel %vm363, %v1076, 0
    %1083 = vmatpush.bf16.msra.mxu0 0
    %1084 = vmatpush.bf16.msra.mxu0 0
    %1085 = vmatpush.bf16.msra.mxu0 0
    %1086 = vmatpush.bf16.msra.mxu0 0
    %1087 = vmatpush.bf16.msra.mxu0 0
    %1088 = vmatpush.bf16.msra.mxu0 0
    %1089 = vmatpush.bf16.msra.mxu0 0
    %1090 = vmatpush.bf16.msra.mxu0 %v1081
    %1091 = vmatmul.bf16.gmra.mxu0 %v1078
    %v1092 = vpop.f32.mrf.mxu0
    %v1093 = vadd.f32 0.0, %v1092
    %v1094 = vpop.f32.mrf.mxu0
    %1095 = vdwg.mxu0
    %1098 = vrot.lane.b32.xlu0 %v1072, 16
    %v1099 = vpop.permute.xlu0 %1098
    %1100 = vrot.lane.b32.xlu0 %v1093, 16
    %v1101 = vpop.permute.xlu0 %1100
    %v1104 = vsel %vm279, %v956, %v1099
    %v1105 = vsel %vm279, %v977, %v1101
    %s1106 = scalar_lea.vmem %s9, 16
    %v1107 = vld [vmem:[%s1106] sm:$0xf]
    %v1108 = vld [vmem:[%s1106 + $0x4] sm:$0xf]
    %v1109 = vld [vmem:[%s1106 + $0x8] sm:$0xf]
    %v1110 = vld [vmem:[%s1106 + $0xc] sm:$0xf]
    %s1111 = scalar_lea.vmem %s10, 1
    %v1112 = vld [vmem:[%s1111] sm:$0x1]
    %v1113 = vpack.c.bf16 %v1105, %v1104
    %v1115 = vperm.slane %v1112, 0
    %v1121 = vunpack.c.l.b16 %v1107
    %v1122 = vunpack.c.l.b16 %v1108
    %v1123 = vunpack.c.l.b16 %v1109
    %v1124 = vunpack.c.l.b16 %v1110
    %v1125 = vpack.c.b16 %v1122, %v1121
    %v1126 = vpack.c.b16 %v1124, %v1123
    %v1130 = vsel %vm172, %v1113, 0
    %1132 = vmatpush.bf16.msra.mxu0 0
    %1133 = vmatpush.bf16.msra.mxu0 0
    %1134 = vmatpush.bf16.msra.mxu0 0
    %1135 = vmatpush.bf16.msra.mxu0 0
    %1136 = vmatpush.bf16.msra.mxu0 0
    %1137 = vmatpush.bf16.msra.mxu0 0
    %1138 = vmatpush.bf16.msra.mxu0 %v1126
    %1139 = vmatpush.bf16.msra.mxu0 %v1125
    %1140 = vmatmul.bf16.gmra.mxu0 %v1130
    %v1141 = vpop.f32.mrf.mxu0
    %v1142 = vadd.f32 %v1115, %v1141
    %v1143 = vpop.f32.mrf.mxu0
    %v1144 = vadd.f32 %v1115, %v1143
    %1145 = vdwg.mxu0
    %v1146 = vadd.f32 %v1142, %v818
    %v1147 = vadd.f32 %v1144, %v819
    %s1148 = scalar_lea.vmem %s11, 1
    %v1149 = vld [vmem:[%s1148] sm:$0x1]
    %s1150 = scalar_lea.vmem %s12, 1
    %v1151 = vld [vmem:[%s1150] sm:$0x1]
    %v1152 = vsel %vm172, %v1146, 0.0
    %1153 = vadd.xlane.f32.xlu0 %v1152
    %v1154 = vpop.xlane.xlu0 %1153
    %v1155 = vsel %vm172, %v1147, 0.0
    %1156 = vadd.xlane.f32.xlu0 %v1155
    %v1157 = vpop.xlane.xlu0 %1156
    %v1158 = vmul.f32 %v1154, %v185
    %v1159 = vmul.f32 %v1157, %v185
    %v1160 = vsub.f32 %v1146, %v1158
    %v1161 = vsub.f32 %v1147, %v1159
    %v1162 = vmul.f32 %v1160, %v1160
    %v1163 = vmul.f32 %v1161, %v1161
    %v1164 = vsel %vm172, %v1162, 0.0
    %1165 = vadd.xlane.f32.xlu0 %v1164
    %v1166 = vpop.xlane.xlu0 %1165
    %v1167 = vsel %vm172, %v1163, 0.0
    %1168 = vadd.xlane.f32.xlu0 %v1167
    %v1169 = vpop.xlane.xlu0 %1168
    %v1170 = vmul.f32 %v1166, %v185
    %v1171 = vmul.f32 %v1169, %v185
    %v1172 = vadd.f32 %v1170, 1e-12
    %v1173 = vadd.f32 %v1171, 1e-12
    %v1174 = vrsqrt.pop %v1172
    %v1175 = vmul.f32 %v1174, %v1172
    %v1176 = vmul.f32 %v1175, %v1174
    %v1177 = vmul.f32 0.5, %v1176
    %v1178 = vsub.f32 1.5, %v1177
    %v1179 = vmul.f32 %v1174, %v1178
    %vm1180 = vweird.f32 %v1172
    %vm1181 = vweird.f32 %v1174
    %vm1182 = vmor %vm1180, %vm1181
    %v1183 = vsel %vm1182, %v1174, %v1179
    %v1184 = vrsqrt.pop %v1173
    %v1185 = vmul.f32 %v1184, %v1173
    %v1186 = vmul.f32 %v1185, %v1184
    %v1187 = vmul.f32 0.5, %v1186
    %v1188 = vsub.f32 1.5, %v1187
    %v1189 = vmul.f32 %v1184, %v1188
    %vm1190 = vweird.f32 %v1173
    %vm1191 = vweird.f32 %v1184
    %vm1192 = vmor %vm1190, %vm1191
    %v1193 = vsel %vm1192, %v1184, %v1189
    %v1194 = vmul.f32 %v1160, %v1183
    %v1195 = vmul.f32 %v1161, %v1193
    %v1197 = vperm.slane %v1149, 0
    %v1199 = vmul.f32 %v1194, %v1197
    %v1200 = vmul.f32 %v1195, %v1197
    %v1202 = vperm.slane %v1151, 0
    %v1204 = vadd.f32 %v1199, %v1202
    %v1205 = vadd.f32 %v1200, %v1202
    %s1206 = scalar_lea.vmem %s13, 16
    %v1207 = vld [vmem:[%s1206] sm:$0xf]
    %v1208 = vld [vmem:[%s1206 + $0x4] sm:$0xf]
    %v1209 = vld [vmem:[%s1206 + $0x8] sm:$0xf]
    %v1210 = vld [vmem:[%s1206 + $0xc] sm:$0xf]
    %s1211 = scalar_lea.vmem %s14, 1
    %v1212 = vld [vmem:[%s1211] sm:$0x1]
    %v1213 = vpack.c.bf16 %v1205, %v1204
    %v1215 = vperm.slane %v1212, 0
    %v1221 = vunpack.c.l.b16 %v1207
    %v1222 = vunpack.c.l.b16 %v1208
    %v1223 = vunpack.c.l.b16 %v1209
    %v1224 = vunpack.c.l.b16 %v1210
    %v1225 = vpack.c.b16 %v1222, %v1221
    %v1226 = vpack.c.b16 %v1224, %v1223
    %v1230 = vsel %vm172, %v1213, 0
    %1232 = vmatpush.bf16.msra.mxu0 0
    %1233 = vmatpush.bf16.msra.mxu0 0
    %1234 = vmatpush.bf16.msra.mxu0 0
    %1235 = vmatpush.bf16.msra.mxu0 0
    %1236 = vmatpush.bf16.msra.mxu0 0
    %1237 = vmatpush.bf16.msra.mxu0 0
    %1238 = vmatpush.bf16.msra.mxu0 %v1226
    %1239 = vmatpush.bf16.msra.mxu0 %v1225
    %1240 = vmatmul.bf16.gmra.mxu0 %v1230
    %v1241 = vpop.f32.mrf.mxu0
    %v1242 = vadd.f32 %v1215, %v1241
    %v1243 = vpop.f32.mrf.mxu0
    %v1244 = vadd.f32 %v1215, %v1243
    %1245 = vdwg.mxu0
    %v1246 = vmul.f32 %v1242, 0.5
    %v1247 = vmul.f32 %v1244, 0.5
    %v1248 = vmul.f32 %v1242, 0.044715
    %v1249 = vmul.f32 %v1244, 0.044715
    %v1250 = vmul.f32 %v1248, %v1242
    %v1251 = vmul.f32 %v1249, %v1244
    %v1252 = vmul.f32 %v1250, %v1242
    %v1253 = vmul.f32 %v1251, %v1244
    %v1254 = vadd.f32 %v1242, %v1252
    %v1255 = vadd.f32 %v1244, %v1253
    %v1256 = vmul.f32 %v1254, 0.7978846
    %v1257 = vmul.f32 %v1255, 0.7978846
    %v1258 = vtanh.pop %v1256
    %v1259 = vtanh.pop %v1257
    %v1260 = vadd.f32 %v1258, 1.0
    %v1261 = vadd.f32 %v1259, 1.0
    %v1262 = vmul.f32 %v1246, %v1260
    %v1263 = vmul.f32 %v1247, %v1261
    %s1264 = scalar_lea.vmem %s15, 64
    %v1265 = vld [vmem:[%s1264] sm:$0xf]
    %v1266 = vld [vmem:[%s1264 + $0x4] sm:$0xf]
    %v1267 = vld [vmem:[%s1264 + $0x8] sm:$0xf]
    %v1268 = vld [vmem:[%s1264 + $0xc] sm:$0xf]
    %v1269 = vld [vmem:[%s1264 + $0x10] sm:$0xf]
    %v1270 = vld [vmem:[%s1264 + $0x14] sm:$0xf]
    %v1271 = vld [vmem:[%s1264 + $0x18] sm:$0xf]
    %v1272 = vld [vmem:[%s1264 + $0x1c] sm:$0xf]
    %v1273 = vld [vmem:[%s1264 + $0x20] sm:$0xf]
    %v1274 = vld [vmem:[%s1264 + $0x24] sm:$0xf]
    %v1275 = vld [vmem:[%s1264 + $0x28] sm:$0xf]
    %v1276 = vld [vmem:[%s1264 + $0x2c] sm:$0xf]
    %v1277 = vld [vmem:[%s1264 + $0x30] sm:$0xf]
    %v1278 = vld [vmem:[%s1264 + $0x34] sm:$0xf]
    %v1279 = vld [vmem:[%s1264 + $0x38] sm:$0xf]
    %v1280 = vld [vmem:[%s1264 + $0x3c] sm:$0xf]
    %s1281 = scalar_lea.vmem %s16, 1
    %v1282 = vld [vmem:[%s1281] sm:$0x1]
    %v1283 = vpack.c.bf16 %v1263, %v1262
    %v1285 = vperm.slane %v1282, 0
    %v1303 = vunpack.c.l.b16 %v1265
    %v1304 = vunpack.c.l.b16 %v1266
    %v1305 = vunpack.c.l.b16 %v1267
    %v1306 = vunpack.c.l.b16 %v1268
    %v1307 = vunpack.c.l.b16 %v1269
    %v1308 = vunpack.c.l.b16 %v1270
    %v1309 = vunpack.c.l.b16 %v1271
    %v1310 = vunpack.c.l.b16 %v1272
    %v1311 = vunpack.c.l.b16 %v1273
    %v1312 = vunpack.c.l.b16 %v1274
    %v1313 = vunpack.c.l.b16 %v1275
    %v1314 = vunpack.c.l.b16 %v1276
    %v1315 = vunpack.c.l.b16 %v1277
    %v1316 = vunpack.c.l.b16 %v1278
    %v1317 = vunpack.c.l.b16 %v1279
    %v1318 = vunpack.c.l.b16 %v1280
    %v1319 = vpack.c.b16 %v1304, %v1303
    %v1320 = vpack.c.b16 %v1306, %v1305
    %v1321 = vpack.c.b16 %v1308, %v1307
    %v1322 = vpack.c.b16 %v1310, %v1309
    %v1323 = vpack.c.b16 %v1312, %v1311
    %v1324 = vpack.c.b16 %v1314, %v1313
    %v1325 = vpack.c.b16 %v1316, %v1315
    %v1326 = vpack.c.b16 %v1318, %v1317
    %1335 = vmatpush.bf16.msra.mxu0 %v1326
    %1336 = vmatpush.bf16.msra.mxu0 %v1325
    %1337 = vmatpush.bf16.msra.mxu0 %v1324
    %1338 = vmatpush.bf16.msra.mxu0 %v1323
    %1339 = vmatpush.bf16.msra.mxu0 %v1322
    %1340 = vmatpush.bf16.msra.mxu0 %v1321
    %1341 = vmatpush.bf16.msra.mxu0 %v1320
    %1342 = vmatpush.bf16.msra.mxu0 %v1319
    %1343 = vmatmul.bf16.gmra.mxu0 %v1283
    %v1344 = vpop.f32.mrf.mxu0
    %v1345 = vadd.f32 %v1285, %v1344
    %v1346 = vpop.f32.mrf.mxu0
    %v1347 = vadd.f32 %v1285, %v1346
    %1348 = vdwg.mxu0
    %v1349 = vadd.f32 %v1345, %v1204
    %v1350 = vadd.f32 %v1347, %v1205
    %s1351 = scalar_lea.vmem %s17, 1
    %v1352 = vld [vmem:[%s1351] sm:$0x1]
    %s1353 = scalar_lea.vmem %s18, 1
    %v1354 = vld [vmem:[%s1353] sm:$0x1]
    %v1355 = vsel %vm172, %v1349, 0.0
    %1356 = vadd.xlane.f32.xlu0 %v1355
    %v1357 = vpop.xlane.xlu0 %1356
    %v1358 = vsel %vm172, %v1350, 0.0
    %1359 = vadd.xlane.f32.xlu0 %v1358
    %v1360 = vpop.xlane.xlu0 %1359
    %v1361 = vmul.f32 %v1357, %v185
    %v1362 = vmul.f32 %v1360, %v185
    %v1363 = vsub.f32 %v1349, %v1361
    %v1364 = vsub.f32 %v1350, %v1362
    %v1365 = vmul.f32 %v1363, %v1363
    %v1366 = vmul.f32 %v1364, %v1364
    %v1367 = vsel %vm172, %v1365, 0.0
    %1368 = vadd.xlane.f32.xlu0 %v1367
    %v1369 = vpop.xlane.xlu0 %1368
    %v1370 = vsel %vm172, %v1366, 0.0
    %1371 = vadd.xlane.f32.xlu0 %v1370
    %v1372 = vpop.xlane.xlu0 %1371
    %v1373 = vmul.f32 %v1369, %v185
    %v1374 = vmul.f32 %v1372, %v185
    %v1375 = vadd.f32 %v1373, 1e-12
    %v1376 = vadd.f32 %v1374, 1e-12
    %v1377 = vrsqrt.pop %v1375
    %v1378 = vmul.f32 %v1377, %v1375
    %v1379 = vmul.f32 %v1378, %v1377
    %v1380 = vmul.f32 0.5, %v1379
    %v1381 = vsub.f32 1.5, %v1380
    %v1382 = vmul.f32 %v1377, %v1381
    %vm1383 = vweird.f32 %v1375
    %vm1384 = vweird.f32 %v1377
    %vm1385 = vmor %vm1383, %vm1384
    %v1386 = vsel %vm1385, %v1377, %v1382
    %v1387 = vrsqrt.pop %v1376
    %v1388 = vmul.f32 %v1387, %v1376
    %v1389 = vmul.f32 %v1388, %v1387
    %v1390 = vmul.f32 0.5, %v1389
    %v1391 = vsub.f32 1.5, %v1390
    %v1392 = vmul.f32 %v1387, %v1391
    %vm1393 = vweird.f32 %v1376
    %vm1394 = vweird.f32 %v1387
    %vm1395 = vmor %vm1393, %vm1394
    %v1396 = vsel %vm1395, %v1387, %v1392
    %v1397 = vmul.f32 %v1363, %v1386
    %v1398 = vmul.f32 %v1364, %v1396
    %v1400 = vperm.slane %v1352, 0
    %v1402 = vmul.f32 %v1397, %v1400
    %v1403 = vmul.f32 %v1398, %v1400
    %v1405 = vperm.slane %v1354, 0
    %v1407 = vadd.f32 %v1402, %v1405
    %v1408 = vadd.f32 %v1403, %v1405
    %v1411 = vrot.slane %v1408, 7
    %vm1412 = vcmask 1041409
    %v1413 = vsel %vm1412, %v1411, %v1407
    %vm1415 = vcmask 254976
    %1416 = vst.msk [vmem:[#allocation2] sm:$0x3] %vm1415, %v1413
    // Predicated region
    $region78: #{bert_encoder_forward.1} parent=1 // pred_check
      _
    $region79: #{bert_encoder_forward.1} parent=1 // pred_check_branch
      %1418 = sbr.rel (0) target = $region81
    $region80: #{bert_encoder_forward.1} parent=1 // pred_region
      %1420 = vsyncadd [#allocation3], 0
      %s1422 = sshll.u32 [#allocation2], 4
      %s1423 = int_to_ptr.vmem [resolvable:$true] %s1422
      %s1424 = sshll.u32 %s19, 4
      %s1425 = int_to_ptr.hbm [resolvable:$true] %s1424
      %1427 = dma.vmem_to_hbm [thread:$0]  %s1423, 32, %s1425, [#allocation3]
    $region81: #{bert_encoder_forward.1} parent=1 // pred_fallthru
      _
    // Predicated region
    $region82: #{bert_encoder_forward.1} parent=1 // pred_check
      _
    $region83: #{bert_encoder_forward.1} parent=1 // pred_check_branch
      %1429 = sbr.rel (0) target = $region85
    $region84: #{bert_encoder_forward.1} parent=1 // pred_region
      %1431 = dma.done [#allocation3], 32
    $region85: #{bert_encoder_forward.1} parent=1 // pred_fallthru
      _
    %1432 = vsyncpa [#allocation3], 1

</llo_original>
